<compile_context>
chip_gen: v6e
topology: v6e:2x2x1
jax: 0.10.0
libtpu: 0.0.40
codegen_flags: <defaults>
</compile_context>

<pallas_src>
import functools
import math

import jax
import jax.numpy as jnp
from jax.experimental import pallas as pl
from jax.experimental.pallas import tpu as pltpu

# ---------------- model hyper-parameters (small, BERT-like) ----------------
HIDDEN = 32
N_HEADS = 2
HEAD_DIM = HIDDEN // N_HEADS
INTERMEDIATE = 64
N_LAYERS = 2
VOCAB = 100
MAX_POS = 16
TYPE_VOCAB = 2
NUM_LABELS = 9
CLS_PAD = 128                      # lane-dense classifier output width
LN_EPS = 1e-12                     # BERT LayerNorm eps
ATTN_SCALE = 1.0 / math.sqrt(HEAD_DIM)


# ------------------------------ in-kernel math ------------------------------
def _layernorm(x, g, b):
    mean = jnp.mean(x, axis=-1, keepdims=True)
    cen = x - mean
    var = jnp.mean(cen * cen, axis=-1, keepdims=True)
    return cen * jax.lax.rsqrt(var + LN_EPS) * g + b


def _gelu(x):
    # TODO(synk): HF BERT "gelu" is the exact erf formulation; the tanh approximation
    # is used here (tanh runs on the EUP; erf lowering in Mosaic is not guaranteed).
    c = jnp.float32(math.sqrt(2.0 / math.pi))
    return 0.5 * x * (1.0 + jnp.tanh(c * (x + 0.044715 * x * x * x)))


# --------------------------- fused forward kernel ---------------------------
def _ner_fused_kernel(
    emb_ref, mask_ref,
    emb_ln_g_ref, emb_ln_b_ref,
    qkv_w_ref, qkv_b_ref, o_w_ref, o_b_ref,
    ln1_g_ref, ln1_b_ref,
    ff1_w_ref, ff1_b_ref, ff2_w_ref, ff2_b_ref,
    ln2_g_ref, ln2_b_ref,
    cls_w_ref, cls_b_ref,
    logits_ref,                 # output block: (1, S, CLS_PAD) lane-dense slab
    *, seq,
):
    H, dH, nH, S = HIDDEN, HEAD_DIM, N_HEADS, seq
    bf16, f32 = jnp.bfloat16, jnp.float32

    # Embedding LayerNorm (no residual -> no zeros buffer). f32 throughout.
    x = _layernorm(emb_ref[0], emb_ln_g_ref[...], emb_ln_b_ref[...])        # (S, H)

    # Additive key mask, broadcast ONCE (JAX does not CSE broadcast_in_dim).
    mask_bcast = jnp.broadcast_to(mask_ref[0], (S, S))                      # (S, S)

    for l in range(N_LAYERS):      # static unroll; all weights stay VMEM-resident
        # ---- fused QKV projection: single (S, H)bf16 @ (H, 3H)bf16 MXU op ----
        qkv = jnp.dot(x.astype(bf16), qkv_w_ref[l],
                      preferred_element_type=f32) + qkv_b_ref[l]             # (S, 3H) f32
        qkv16 = qkv.astype(bf16)

        # ---- multi-head self-attention: per-head tiles, context kept in vregs ----
        # TODO(synk): with nH=2 the head loop stays statically unrolled; the lane
        # slices at sub-128 offsets are unavoidable at dH=16 without a relayout.
        head_ctx = []
        for h in range(nH):
            q_h = qkv16[:, h * dH:(h + 1) * dH]                              # (S, dH)
            k_h = qkv16[:, H + h * dH:H + (h + 1) * dH]                      # (S, dH)
            v_h = qkv16[:, 2 * H + h * dH:2 * H + (h + 1) * dH]              # (S, dH)
            s = jax.lax.dot_general(
                q_h, k_h, (((1,), (1,)), ((), ())),
                preferred_element_type=f32) * ATTN_SCALE                     # (S, S) f32
            s = s + mask_bcast
            s = s - jnp.max(s, axis=-1, keepdims=True)
            p = jnp.exp(s)
            p = p * pl.reciprocal(jnp.sum(p, axis=-1, keepdims=True), approx=True)
            head_ctx.append(jnp.dot(p.astype(bf16), v_h,
                                    preferred_element_type=f32))             # (S, dH)
        ctx = jnp.concatenate(head_ctx, axis=-1)                             # (S, H) in vregs

        # ---- attention output projection + add & LayerNorm ----
        attn_out = jnp.dot(ctx.astype(bf16), o_w_ref[l],
                           preferred_element_type=f32) + o_b_ref[l]
        x = _layernorm(attn_out + x, ln1_g_ref[l], ln1_b_ref[l])

        # ---- feed-forward (GELU, f32 elementwise) + add & LayerNorm ----
        inter = _gelu(jnp.dot(x.astype(bf16), ff1_w_ref[l],
                              preferred_element_type=f32) + ff1_b_ref[l])
        ffn = jnp.dot(inter.astype(bf16), ff2_w_ref[l],
                      preferred_element_type=f32) + ff2_b_ref[l]
        x = _layernorm(ffn + x, ln2_g_ref[l], ln2_b_ref[l])

    # ---- token-classification head (dropout = identity): lane-dense unmasked store ----
    logits_ref[0] = jnp.dot(x.astype(bf16), cls_w_ref[...],
                            preferred_element_type=f32) + cls_b_ref[...]


# -------------------------- parameter construction -------------------------
def init_params(key):
    std = 0.02
    keys = list(jax.random.split(key, 64))
    it = iter(keys)

    def nrm(shape):
        return jax.random.normal(next(it), shape, dtype=jnp.float32) * std

    p = {
        "word_emb": nrm((VOCAB, HIDDEN)),
        "pos_emb": nrm((MAX_POS, HIDDEN)),
        "type_emb": nrm((TYPE_VOCAB, HIDDEN)),
        "emb_ln_g": jnp.ones((HIDDEN,), jnp.float32),
        "emb_ln_b": jnp.zeros((HIDDEN,), jnp.float32),
        "cls_w": nrm((HIDDEN, NUM_LABELS)),
        "cls_b": jnp.zeros((NUM_LABELS,), jnp.float32),
        "layers": [],
    }
    for _ in range(N_LAYERS):
        L = {
            "q_w": nrm((HIDDEN, HIDDEN)), "q_b": jnp.zeros((HIDDEN,), jnp.float32),
            "k_w": nrm((HIDDEN, HIDDEN)), "k_b": jnp.zeros((HIDDEN,), jnp.float32),
            "v_w": nrm((HIDDEN, HIDDEN)), "v_b": jnp.zeros((HIDDEN,), jnp.float32),
            "o_w": nrm((HIDDEN, HIDDEN)), "o_b": jnp.zeros((HIDDEN,), jnp.float32),
            "ln1_g": jnp.ones((HIDDEN,), jnp.float32), "ln1_b": jnp.zeros((HIDDEN,), jnp.float32),
            "ff1_w": nrm((HIDDEN, INTERMEDIATE)), "ff1_b": jnp.zeros((INTERMEDIATE,), jnp.float32),
            "ff2_w": nrm((INTERMEDIATE, HIDDEN)), "ff2_b": jnp.zeros((HIDDEN,), jnp.float32),
            "ln2_g": jnp.ones((HIDDEN,), jnp.float32), "ln2_b": jnp.zeros((HIDDEN,), jnp.float32),
        }
        p["layers"].append(L)
    return p


def _pack_params(params):
    """Stack per-layer weights (leading L dim), merge QKV, bf16 matmul weights,
    f32 biases / LayerNorm params, pad classifier to 128 lanes."""
    H, I = HIDDEN, INTERMEDIATE
    layers = params["layers"]
    bf16, f32 = jnp.bfloat16, jnp.float32

    def stack(fn, dtype):
        return jnp.stack([fn(l) for l in layers]).astype(dtype)

    return dict(
        emb_ln_g=params["emb_ln_g"].reshape(1, H).astype(f32),
        emb_ln_b=params["emb_ln_b"].reshape(1, H).astype(f32),
        qkv_w=stack(lambda l: jnp.concatenate([l["q_w"], l["k_w"], l["v_w"]], axis=1), bf16),
        qkv_b=stack(lambda l: jnp.concatenate([l["q_b"], l["k_b"], l["v_b"]]).reshape(1, 3 * H), f32),
        o_w=stack(lambda l: l["o_w"], bf16),
        o_b=stack(lambda l: l["o_b"].reshape(1, H), f32),
        ln1_g=stack(lambda l: l["ln1_g"].reshape(1, H), f32),
        ln1_b=stack(lambda l: l["ln1_b"].reshape(1, H), f32),
        ff1_w=stack(lambda l: l["ff1_w"], bf16),
        ff1_b=stack(lambda l: l["ff1_b"].reshape(1, I), f32),
        ff2_w=stack(lambda l: l["ff2_w"], bf16),
        ff2_b=stack(lambda l: l["ff2_b"].reshape(1, H), f32),
        ln2_g=stack(lambda l: l["ln2_g"].reshape(1, H), f32),
        ln2_b=stack(lambda l: l["ln2_b"].reshape(1, H), f32),
        cls_w=jnp.zeros((H, CLS_PAD), f32).at[:, :NUM_LABELS].set(params["cls_w"]).astype(bf16),
        cls_b=jnp.zeros((1, CLS_PAD), f32).at[:, :NUM_LABELS].set(params["cls_b"]),
    )


# ------------------------------- forward pass -------------------------------
def ner_forward(params, input_ids, attention_mask, token_type_ids):
    B, S = input_ids.shape
    assert S <= MAX_POS, f"sequence length {S} exceeds MAX_POS={MAX_POS}"
    H = HIDDEN

    # Embedding gathers stay in XLA (glue at VOCAB=100); the sum feeds the kernel.
    we = jnp.take(params["word_emb"], input_ids, axis=0)          # (B, S, H)
    pe = params["pos_emb"][:S]                                    # (S, H)
    te = jnp.take(params["type_emb"], token_type_ids, axis=0)     # (B, S, H)
    emb = (we + pe[None, :, :] + te).astype(jnp.float32)          # (B, S, H)

    # Extended additive attention mask: (1 - mask) * -1e9, shape (B, 1, S).
    add_mask = ((1.0 - attention_mask.astype(jnp.float32)) * -1e9).reshape(B, 1, S)

    pk = _pack_params(params)
    weight_args = (
        pk["emb_ln_g"], pk["emb_ln_b"],
        pk["qkv_w"], pk["qkv_b"], pk["o_w"], pk["o_b"],
        pk["ln1_g"], pk["ln1_b"],
        pk["ff1_w"], pk["ff1_b"], pk["ff2_w"], pk["ff2_b"],
        pk["ln2_g"], pk["ln2_b"],
        pk["cls_w"], pk["cls_b"],
    )

    vmem_full = pl.BlockSpec(memory_space=pltpu.MemorySpace.VMEM)   # whole-array, VMEM-resident
    in_specs = [
        pl.BlockSpec((1, S, H), lambda b: (b, 0, 0)),               # per-batch token slab
        pl.BlockSpec((1, 1, S), lambda b: (b, 0, 0)),               # per-batch additive mask
    ] + [vmem_full] * len(weight_args)

    logits_pad = pl.pallas_call(
        functools.partial(_ner_fused_kernel, seq=S),
        out_shape=jax.ShapeDtypeStruct((B, S, CLS_PAD), jnp.float32),
        grid=(B,),                                                  # parallel over batch (v7x: 2 TCs)
        in_specs=in_specs,
        out_specs=pl.BlockSpec((1, S, CLS_PAD), lambda b: (b, 0, 0)),
        compiler_params=pltpu.CompilerParams(dimension_semantics=("parallel",)),
    )(emb, add_mask, *weight_args)

    # Slice the lane-dense slab down to the real label count outside the kernel.
    return logits_pad[:, :, :NUM_LABELS]


# ---------------------------------- main ------------------------------------
if __name__ == "__main__":
    key = jax.random.PRNGKey(0)
    pkey, ikey = jax.random.split(key)

    B, S = 2, 8
    params = init_params(pkey)
    input_ids = jax.random.randint(ikey, (B, S), 0, VOCAB, dtype=jnp.int32)
    attention_mask = jnp.ones((B, S), dtype=jnp.int32).at[1, 6:].set(0)  # pad last 2 of ex-1
    token_type_ids = jnp.zeros((B, S), dtype=jnp.int32)

    fwd = jax.jit(ner_forward)
    logits = fwd(params, input_ids, attention_mask, token_type_ids)
    logits = jax.block_until_ready(logits)

    assert logits.shape == (B, S, NUM_LABELS), logits.shape
    assert logits.dtype == jnp.float32
    assert bool(jnp.all(jnp.isfinite(logits)))
    print("KERNEL_OK")
</pallas_src>

<mosaic_0001>
module attributes {stable_mosaic.version = 11 : i64} {
  func.func @_ner_fused_kernel(%arg0: i32, %arg1: memref<1x8x32xf32, #tpu.memory_space<vmem>>, %arg2: memref<1x1x8xf32, #tpu.memory_space<vmem>>, %arg3: memref<1x32xf32, #tpu.memory_space<vmem>>, %arg4: memref<1x32xf32, #tpu.memory_space<vmem>>, %arg5: memref<2x32x96xbf16, #tpu.memory_space<vmem>>, %arg6: memref<2x1x96xf32, #tpu.memory_space<vmem>>, %arg7: memref<2x32x32xbf16, #tpu.memory_space<vmem>>, %arg8: memref<2x1x32xf32, #tpu.memory_space<vmem>>, %arg9: memref<2x1x32xf32, #tpu.memory_space<vmem>>, %arg10: memref<2x1x32xf32, #tpu.memory_space<vmem>>, %arg11: memref<2x32x64xbf16, #tpu.memory_space<vmem>>, %arg12: memref<2x1x64xf32, #tpu.memory_space<vmem>>, %arg13: memref<2x64x32xbf16, #tpu.memory_space<vmem>>, %arg14: memref<2x1x32xf32, #tpu.memory_space<vmem>>, %arg15: memref<2x1x32xf32, #tpu.memory_space<vmem>>, %arg16: memref<2x1x32xf32, #tpu.memory_space<vmem>>, %arg17: memref<32x128xbf16, #tpu.memory_space<vmem>>, %arg18: memref<1x128xf32, #tpu.memory_space<vmem>>, %arg19: memref<1x8x128xf32, #tpu.memory_space<vmem>>) attributes {dimension_semantics = [#tpu.dimension_semantics<parallel>], iteration_bounds = array<i64: 2>, scalar_prefetch = 0 : i64, scratch_operands = 0 : i64, tpu.core_type = #tpu.core_type<tc>, window_params = [{transform_indices = @transform_0, window_bounds = array<i64: 1, 8, 32>}, {transform_indices = @transform_1, window_bounds = array<i64: 1, 1, 8>}, {pipeline_mode = #tpu.pipeline_mode<synchronous>, transform_indices = @transform_2, window_bounds = array<i64: 1, 32>}, {pipeline_mode = #tpu.pipeline_mode<synchronous>, transform_indices = @transform_3, window_bounds = array<i64: 1, 32>}, {pipeline_mode = #tpu.pipeline_mode<synchronous>, transform_indices = @transform_4, window_bounds = array<i64: 2, 32, 96>}, {pipeline_mode = #tpu.pipeline_mode<synchronous>, transform_indices = @transform_5, window_bounds = array<i64: 2, 1, 96>}, {pipeline_mode = #tpu.pipeline_mode<synchronous>, transform_indices = @transform_6, window_bounds = array<i64: 2, 32, 32>}, {pipeline_mode = #tpu.pipeline_mode<synchronous>, transform_indices = @transform_7, window_bounds = array<i64: 2, 1, 32>}, {pipeline_mode = #tpu.pipeline_mode<synchronous>, transform_indices = @transform_8, window_bounds = array<i64: 2, 1, 32>}, {pipeline_mode = #tpu.pipeline_mode<synchronous>, transform_indices = @transform_9, window_bounds = array<i64: 2, 1, 32>}, {pipeline_mode = #tpu.pipeline_mode<synchronous>, transform_indices = @transform_10, window_bounds = array<i64: 2, 32, 64>}, {pipeline_mode = #tpu.pipeline_mode<synchronous>, transform_indices = @transform_11, window_bounds = array<i64: 2, 1, 64>}, {pipeline_mode = #tpu.pipeline_mode<synchronous>, transform_indices = @transform_12, window_bounds = array<i64: 2, 64, 32>}, {pipeline_mode = #tpu.pipeline_mode<synchronous>, transform_indices = @transform_13, window_bounds = array<i64: 2, 1, 32>}, {pipeline_mode = #tpu.pipeline_mode<synchronous>, transform_indices = @transform_14, window_bounds = array<i64: 2, 1, 32>}, {pipeline_mode = #tpu.pipeline_mode<synchronous>, transform_indices = @transform_15, window_bounds = array<i64: 2, 1, 32>}, {pipeline_mode = #tpu.pipeline_mode<synchronous>, transform_indices = @transform_16, window_bounds = array<i64: 32, 128>}, {pipeline_mode = #tpu.pipeline_mode<synchronous>, transform_indices = @transform_17, window_bounds = array<i64: 1, 128>}, {transform_indices = @transform_18, window_bounds = array<i64: 1, 8, 128>}]} {
    %c0 = arith.constant 0 : index
    %c0_0 = arith.constant 0 : index
    %c0_1 = arith.constant 0 : index
    %0 = vector.load %arg1[%c0, %c0_0, %c0_1] : memref<1x8x32xf32, #tpu.memory_space<vmem>>, vector<1x8x32xf32>
    %1 = vector.shape_cast %0 : vector<1x8x32xf32> to vector<8x32xf32>
    %c0_2 = arith.constant 0 : index
    %c0_3 = arith.constant 0 : index
    %2 = vector.load %arg3[%c0_2, %c0_3] : memref<1x32xf32, #tpu.memory_space<vmem>>, vector<1x32xf32>
    %c0_4 = arith.constant 0 : index
    %c0_5 = arith.constant 0 : index
    %3 = vector.load %arg4[%c0_4, %c0_5] : memref<1x32xf32, #tpu.memory_space<vmem>>, vector<1x32xf32>
    %cst = arith.constant dense<0.000000e+00> : vector<8xf32>
    %4 = vector.multi_reduction <add>, %1, %cst [1] : vector<8x32xf32> to vector<8xf32>
    %5 = vector.shape_cast %4 : vector<8xf32> to vector<8x1xf32>
    %cst_6 = arith.constant 3.200000e+01 : f32
    %6 = vector.broadcast %cst_6 : f32 to vector<8x1xf32>
    %7 = arith.divf %5, %6 : vector<8x1xf32>
    %8 = vector.broadcast %7 : vector<8x1xf32> to vector<8x32xf32>
    %9 = arith.subf %1, %8 : vector<8x32xf32>
    %10 = arith.mulf %9, %9 : vector<8x32xf32>
    %cst_7 = arith.constant dense<0.000000e+00> : vector<8xf32>
    %11 = vector.multi_reduction <add>, %10, %cst_7 [1] : vector<8x32xf32> to vector<8xf32>
    %12 = vector.shape_cast %11 : vector<8xf32> to vector<8x1xf32>
    %cst_8 = arith.constant 3.200000e+01 : f32
    %13 = vector.broadcast %cst_8 : f32 to vector<8x1xf32>
    %14 = arith.divf %12, %13 : vector<8x1xf32>
    %cst_9 = arith.constant 9.99999996E-13 : f32
    %15 = vector.broadcast %cst_9 : f32 to vector<8x1xf32>
    %16 = arith.addf %14, %15 : vector<8x1xf32>
    %17 = math.rsqrt %16 : vector<8x1xf32>
    %18 = vector.broadcast %17 : vector<8x1xf32> to vector<8x32xf32>
    %19 = arith.mulf %9, %18 : vector<8x32xf32>
    %20 = vector.broadcast %2 : vector<1x32xf32> to vector<8x32xf32>
    %21 = arith.mulf %19, %20 : vector<8x32xf32>
    %22 = vector.broadcast %3 : vector<1x32xf32> to vector<8x32xf32>
    %23 = arith.addf %21, %22 : vector<8x32xf32>
    %c0_10 = arith.constant 0 : index
    %c0_11 = arith.constant 0 : index
    %c0_12 = arith.constant 0 : index
    %24 = vector.load %arg2[%c0_10, %c0_11, %c0_12] : memref<1x1x8xf32, #tpu.memory_space<vmem>>, vector<1x1x8xf32>
    %25 = vector.shape_cast %24 : vector<1x1x8xf32> to vector<1x8xf32>
    %26 = vector.shape_cast %25 : vector<1x8xf32> to vector<1x8xf32>
    %27 = vector.broadcast %26 : vector<1x8xf32> to vector<8x8xf32>
    %28 = arith.truncf %23 : vector<8x32xf32> to vector<8x32xbf16>
    %c0_13 = arith.constant 0 : index
    %c0_14 = arith.constant 0 : index
    %c0_15 = arith.constant 0 : index
    %29 = vector.load %arg5[%c0_13, %c0_14, %c0_15] : memref<2x32x96xbf16, #tpu.memory_space<vmem>>, vector<1x32x96xbf16>
    %30 = vector.shape_cast %29 : vector<1x32x96xbf16> to vector<32x96xbf16>
    %cst_16 = arith.constant dense<0.000000e+00> : vector<8x96xf32>
    %31 = tpu.matmul %28, %30, %cst_16 {dimension_numbers = #tpu.dot_dimension_numbers<[1], [0], [0], [1], [0, 0, 1, 1], [], []>} : vector<8x32xbf16>, vector<32x96xbf16>, vector<8x96xf32> -> vector<8x96xf32>
    %c0_17 = arith.constant 0 : index
    %c0_18 = arith.constant 0 : index
    %c0_19 = arith.constant 0 : index
    %32 = vector.load %arg6[%c0_17, %c0_18, %c0_19] : memref<2x1x96xf32, #tpu.memory_space<vmem>>, vector<1x1x96xf32>
    %33 = vector.shape_cast %32 : vector<1x1x96xf32> to vector<1x96xf32>
    %34 = vector.broadcast %33 : vector<1x96xf32> to vector<8x96xf32>
    %35 = arith.addf %31, %34 : vector<8x96xf32>
    %36 = arith.truncf %35 : vector<8x96xf32> to vector<8x96xbf16>
    %37 = vector.extract_strided_slice %36 {offsets = [0, 0], sizes = [8, 16], strides = [1, 1]} : vector<8x96xbf16> to vector<8x16xbf16>
    %38 = vector.extract_strided_slice %36 {offsets = [0, 32], sizes = [8, 16], strides = [1, 1]} : vector<8x96xbf16> to vector<8x16xbf16>
    %39 = vector.extract_strided_slice %36 {offsets = [0, 64], sizes = [8, 16], strides = [1, 1]} : vector<8x96xbf16> to vector<8x16xbf16>
    %cst_20 = arith.constant dense<0.000000e+00> : vector<8x8xf32>
    %40 = tpu.matmul %37, %38, %cst_20 {dimension_numbers = #tpu.dot_dimension_numbers<[1], [1], [0], [0], [0, 0, 1, 0], [], []>} : vector<8x16xbf16>, vector<8x16xbf16>, vector<8x8xf32> -> vector<8x8xf32>
    %cst_21 = arith.constant 2.500000e-01 : f32
    %41 = vector.broadcast %cst_21 : f32 to vector<8x8xf32>
    %42 = arith.mulf %40, %41 : vector<8x8xf32>
    %43 = arith.addf %42, %27 : vector<8x8xf32>
    %cst_22 = arith.constant dense<0xFF800000> : vector<8xf32>
    %44 = vector.multi_reduction <maximumf>, %43, %cst_22 [1] : vector<8x8xf32> to vector<8xf32>
    %45 = vector.shape_cast %44 : vector<8xf32> to vector<8x1xf32>
    %46 = vector.broadcast %45 : vector<8x1xf32> to vector<8x8xf32>
    %47 = arith.subf %43, %46 : vector<8x8xf32>
    %48 = math.exp %47 : vector<8x8xf32>
    %cst_23 = arith.constant dense<0.000000e+00> : vector<8xf32>
    %49 = vector.multi_reduction <add>, %48, %cst_23 [1] : vector<8x8xf32> to vector<8xf32>
    %50 = vector.shape_cast %49 : vector<8xf32> to vector<8x1xf32>
    %51 = tpu.reciprocal %50 {approx = true} : vector<8x1xf32> -> vector<8x1xf32>
    %52 = vector.broadcast %51 : vector<8x1xf32> to vector<8x8xf32>
    %53 = arith.mulf %48, %52 : vector<8x8xf32>
    %54 = arith.truncf %53 : vector<8x8xf32> to vector<8x8xbf16>
    %cst_24 = arith.constant dense<0.000000e+00> : vector<8x16xf32>
    %55 = tpu.matmul %54, %39, %cst_24 {dimension_numbers = #tpu.dot_dimension_numbers<[1], [0], [0], [1], [0, 0, 1, 1], [], []>} : vector<8x8xbf16>, vector<8x16xbf16>, vector<8x16xf32> -> vector<8x16xf32>
    %56 = vector.extract_strided_slice %36 {offsets = [0, 16], sizes = [8, 16], strides = [1, 1]} : vector<8x96xbf16> to vector<8x16xbf16>
    %57 = vector.extract_strided_slice %36 {offsets = [0, 48], sizes = [8, 16], strides = [1, 1]} : vector<8x96xbf16> to vector<8x16xbf16>
    %58 = vector.extract_strided_slice %36 {offsets = [0, 80], sizes = [8, 16], strides = [1, 1]} : vector<8x96xbf16> to vector<8x16xbf16>
    %cst_25 = arith.constant dense<0.000000e+00> : vector<8x8xf32>
    %59 = tpu.matmul %56, %57, %cst_25 {dimension_numbers = #tpu.dot_dimension_numbers<[1], [1], [0], [0], [0, 0, 1, 0], [], []>} : vector<8x16xbf16>, vector<8x16xbf16>, vector<8x8xf32> -> vector<8x8xf32>
    %cst_26 = arith.constant 2.500000e-01 : f32
    %60 = vector.broadcast %cst_26 : f32 to vector<8x8xf32>
    %61 = arith.mulf %59, %60 : vector<8x8xf32>
    %62 = arith.addf %61, %27 : vector<8x8xf32>
    %cst_27 = arith.constant dense<0xFF800000> : vector<8xf32>
    %63 = vector.multi_reduction <maximumf>, %62, %cst_27 [1] : vector<8x8xf32> to vector<8xf32>
    %64 = vector.shape_cast %63 : vector<8xf32> to vector<8x1xf32>
    %65 = vector.broadcast %64 : vector<8x1xf32> to vector<8x8xf32>
    %66 = arith.subf %62, %65 : vector<8x8xf32>
    %67 = math.exp %66 : vector<8x8xf32>
    %cst_28 = arith.constant dense<0.000000e+00> : vector<8xf32>
    %68 = vector.multi_reduction <add>, %67, %cst_28 [1] : vector<8x8xf32> to vector<8xf32>
    %69 = vector.shape_cast %68 : vector<8xf32> to vector<8x1xf32>
    %70 = tpu.reciprocal %69 {approx = true} : vector<8x1xf32> -> vector<8x1xf32>
    %71 = vector.broadcast %70 : vector<8x1xf32> to vector<8x8xf32>
    %72 = arith.mulf %67, %71 : vector<8x8xf32>
    %73 = arith.truncf %72 : vector<8x8xf32> to vector<8x8xbf16>
    %cst_29 = arith.constant dense<0.000000e+00> : vector<8x16xf32>
    %74 = tpu.matmul %73, %58, %cst_29 {dimension_numbers = #tpu.dot_dimension_numbers<[1], [0], [0], [1], [0, 0, 1, 1], [], []>} : vector<8x8xbf16>, vector<8x16xbf16>, vector<8x16xf32> -> vector<8x16xf32>
    %75 = tpu.concatenate %55, %74 in 1 : vector<8x16xf32>, vector<8x16xf32> -> vector<8x32xf32>
    %76 = arith.truncf %75 : vector<8x32xf32> to vector<8x32xbf16>
    %c0_30 = arith.constant 0 : index
    %c0_31 = arith.constant 0 : index
    %c0_32 = arith.constant 0 : index
    %77 = vector.load %arg7[%c0_30, %c0_31, %c0_32] : memref<2x32x32xbf16, #tpu.memory_space<vmem>>, vector<1x32x32xbf16>
    %78 = vector.shape_cast %77 : vector<1x32x32xbf16> to vector<32x32xbf16>
    %cst_33 = arith.constant dense<0.000000e+00> : vector<8x32xf32>
    %79 = tpu.matmul %76, %78, %cst_33 {dimension_numbers = #tpu.dot_dimension_numbers<[1], [0], [0], [1], [0, 0, 1, 1], [], []>} : vector<8x32xbf16>, vector<32x32xbf16>, vector<8x32xf32> -> vector<8x32xf32>
    %c0_34 = arith.constant 0 : index
    %c0_35 = arith.constant 0 : index
    %c0_36 = arith.constant 0 : index
    %80 = vector.load %arg8[%c0_34, %c0_35, %c0_36] : memref<2x1x32xf32, #tpu.memory_space<vmem>>, vector<1x1x32xf32>
    %81 = vector.shape_cast %80 : vector<1x1x32xf32> to vector<1x32xf32>
    %82 = vector.broadcast %81 : vector<1x32xf32> to vector<8x32xf32>
    %83 = arith.addf %79, %82 : vector<8x32xf32>
    %84 = arith.addf %83, %23 : vector<8x32xf32>
    %c0_37 = arith.constant 0 : index
    %c0_38 = arith.constant 0 : index
    %c0_39 = arith.constant 0 : index
    %85 = vector.load %arg9[%c0_37, %c0_38, %c0_39] : memref<2x1x32xf32, #tpu.memory_space<vmem>>, vector<1x1x32xf32>
    %86 = vector.shape_cast %85 : vector<1x1x32xf32> to vector<1x32xf32>
    %c0_40 = arith.constant 0 : index
    %c0_41 = arith.constant 0 : index
    %c0_42 = arith.constant 0 : index
    %87 = vector.load %arg10[%c0_40, %c0_41, %c0_42] : memref<2x1x32xf32, #tpu.memory_space<vmem>>, vector<1x1x32xf32>
    %88 = vector.shape_cast %87 : vector<1x1x32xf32> to vector<1x32xf32>
    %cst_43 = arith.constant dense<0.000000e+00> : vector<8xf32>
    %89 = vector.multi_reduction <add>, %84, %cst_43 [1] : vector<8x32xf32> to vector<8xf32>
    %90 = vector.shape_cast %89 : vector<8xf32> to vector<8x1xf32>
    %cst_44 = arith.constant 3.200000e+01 : f32
    %91 = vector.broadcast %cst_44 : f32 to vector<8x1xf32>
    %92 = arith.divf %90, %91 : vector<8x1xf32>
    %93 = vector.broadcast %92 : vector<8x1xf32> to vector<8x32xf32>
    %94 = arith.subf %84, %93 : vector<8x32xf32>
    %95 = arith.mulf %94, %94 : vector<8x32xf32>
    %cst_45 = arith.constant dense<0.000000e+00> : vector<8xf32>
    %96 = vector.multi_reduction <add>, %95, %cst_45 [1] : vector<8x32xf32> to vector<8xf32>
    %97 = vector.shape_cast %96 : vector<8xf32> to vector<8x1xf32>
    %cst_46 = arith.constant 3.200000e+01 : f32
    %98 = vector.broadcast %cst_46 : f32 to vector<8x1xf32>
    %99 = arith.divf %97, %98 : vector<8x1xf32>
    %cst_47 = arith.constant 9.99999996E-13 : f32
    %100 = vector.broadcast %cst_47 : f32 to vector<8x1xf32>
    %101 = arith.addf %99, %100 : vector<8x1xf32>
    %102 = math.rsqrt %101 : vector<8x1xf32>
    %103 = vector.broadcast %102 : vector<8x1xf32> to vector<8x32xf32>
    %104 = arith.mulf %94, %103 : vector<8x32xf32>
    %105 = vector.broadcast %86 : vector<1x32xf32> to vector<8x32xf32>
    %106 = arith.mulf %104, %105 : vector<8x32xf32>
    %107 = vector.broadcast %88 : vector<1x32xf32> to vector<8x32xf32>
    %108 = arith.addf %106, %107 : vector<8x32xf32>
    %109 = arith.truncf %108 : vector<8x32xf32> to vector<8x32xbf16>
    %c0_48 = arith.constant 0 : index
    %c0_49 = arith.constant 0 : index
    %c0_50 = arith.constant 0 : index
    %110 = vector.load %arg11[%c0_48, %c0_49, %c0_50] : memref<2x32x64xbf16, #tpu.memory_space<vmem>>, vector<1x32x64xbf16>
    %111 = vector.shape_cast %110 : vector<1x32x64xbf16> to vector<32x64xbf16>
    %cst_51 = arith.constant dense<0.000000e+00> : vector<8x64xf32>
    %112 = tpu.matmul %109, %111, %cst_51 {dimension_numbers = #tpu.dot_dimension_numbers<[1], [0], [0], [1], [0, 0, 1, 1], [], []>} : vector<8x32xbf16>, vector<32x64xbf16>, vector<8x64xf32> -> vector<8x64xf32>
    %c0_52 = arith.constant 0 : index
    %c0_53 = arith.constant 0 : index
    %c0_54 = arith.constant 0 : index
    %113 = vector.load %arg12[%c0_52, %c0_53, %c0_54] : memref<2x1x64xf32, #tpu.memory_space<vmem>>, vector<1x1x64xf32>
    %114 = vector.shape_cast %113 : vector<1x1x64xf32> to vector<1x64xf32>
    %115 = vector.broadcast %114 : vector<1x64xf32> to vector<8x64xf32>
    %116 = arith.addf %112, %115 : vector<8x64xf32>
    %cst_55 = arith.constant 5.000000e-01 : f32
    %117 = vector.broadcast %cst_55 : f32 to vector<8x64xf32>
    %118 = arith.mulf %117, %116 : vector<8x64xf32>
    %cst_56 = arith.constant 4.471500e-02 : f32
    %119 = vector.broadcast %cst_56 : f32 to vector<8x64xf32>
    %120 = arith.mulf %119, %116 : vector<8x64xf32>
    %121 = arith.mulf %120, %116 : vector<8x64xf32>
    %122 = arith.mulf %121, %116 : vector<8x64xf32>
    %123 = arith.addf %116, %122 : vector<8x64xf32>
    %cst_57 = arith.constant 0.797884583 : f32
    %124 = vector.broadcast %cst_57 : f32 to vector<8x64xf32>
    %125 = arith.mulf %124, %123 : vector<8x64xf32>
    %126 = math.tanh %125 : vector<8x64xf32>
    %cst_58 = arith.constant 1.000000e+00 : f32
    %127 = vector.broadcast %cst_58 : f32 to vector<8x64xf32>
    %128 = arith.addf %127, %126 : vector<8x64xf32>
    %129 = arith.mulf %118, %128 : vector<8x64xf32>
    %130 = arith.truncf %129 : vector<8x64xf32> to vector<8x64xbf16>
    %c0_59 = arith.constant 0 : index
    %c0_60 = arith.constant 0 : index
    %c0_61 = arith.constant 0 : index
    %131 = vector.load %arg13[%c0_59, %c0_60, %c0_61] : memref<2x64x32xbf16, #tpu.memory_space<vmem>>, vector<1x64x32xbf16>
    %132 = vector.shape_cast %131 : vector<1x64x32xbf16> to vector<64x32xbf16>
    %cst_62 = arith.constant dense<0.000000e+00> : vector<8x32xf32>
    %133 = tpu.matmul %130, %132, %cst_62 {dimension_numbers = #tpu.dot_dimension_numbers<[1], [0], [0], [1], [0, 0, 1, 1], [], []>} : vector<8x64xbf16>, vector<64x32xbf16>, vector<8x32xf32> -> vector<8x32xf32>
    %c0_63 = arith.constant 0 : index
    %c0_64 = arith.constant 0 : index
    %c0_65 = arith.constant 0 : index
    %134 = vector.load %arg14[%c0_63, %c0_64, %c0_65] : memref<2x1x32xf32, #tpu.memory_space<vmem>>, vector<1x1x32xf32>
    %135 = vector.shape_cast %134 : vector<1x1x32xf32> to vector<1x32xf32>
    %136 = vector.broadcast %135 : vector<1x32xf32> to vector<8x32xf32>
    %137 = arith.addf %133, %136 : vector<8x32xf32>
    %138 = arith.addf %137, %108 : vector<8x32xf32>
    %c0_66 = arith.constant 0 : index
    %c0_67 = arith.constant 0 : index
    %c0_68 = arith.constant 0 : index
    %139 = vector.load %arg15[%c0_66, %c0_67, %c0_68] : memref<2x1x32xf32, #tpu.memory_space<vmem>>, vector<1x1x32xf32>
    %140 = vector.shape_cast %139 : vector<1x1x32xf32> to vector<1x32xf32>
    %c0_69 = arith.constant 0 : index
    %c0_70 = arith.constant 0 : index
    %c0_71 = arith.constant 0 : index
    %141 = vector.load %arg16[%c0_69, %c0_70, %c0_71] : memref<2x1x32xf32, #tpu.memory_space<vmem>>, vector<1x1x32xf32>
    %142 = vector.shape_cast %141 : vector<1x1x32xf32> to vector<1x32xf32>
    %cst_72 = arith.constant dense<0.000000e+00> : vector<8xf32>
    %143 = vector.multi_reduction <add>, %138, %cst_72 [1] : vector<8x32xf32> to vector<8xf32>
    %144 = vector.shape_cast %143 : vector<8xf32> to vector<8x1xf32>
    %cst_73 = arith.constant 3.200000e+01 : f32
    %145 = vector.broadcast %cst_73 : f32 to vector<8x1xf32>
    %146 = arith.divf %144, %145 : vector<8x1xf32>
    %147 = vector.broadcast %146 : vector<8x1xf32> to vector<8x32xf32>
    %148 = arith.subf %138, %147 : vector<8x32xf32>
    %149 = arith.mulf %148, %148 : vector<8x32xf32>
    %cst_74 = arith.constant dense<0.000000e+00> : vector<8xf32>
    %150 = vector.multi_reduction <add>, %149, %cst_74 [1] : vector<8x32xf32> to vector<8xf32>
    %151 = vector.shape_cast %150 : vector<8xf32> to vector<8x1xf32>
    %cst_75 = arith.constant 3.200000e+01 : f32
    %152 = vector.broadcast %cst_75 : f32 to vector<8x1xf32>
    %153 = arith.divf %151, %152 : vector<8x1xf32>
    %cst_76 = arith.constant 9.99999996E-13 : f32
    %154 = vector.broadcast %cst_76 : f32 to vector<8x1xf32>
    %155 = arith.addf %153, %154 : vector<8x1xf32>
    %156 = math.rsqrt %155 : vector<8x1xf32>
    %157 = vector.broadcast %156 : vector<8x1xf32> to vector<8x32xf32>
    %158 = arith.mulf %148, %157 : vector<8x32xf32>
    %159 = vector.broadcast %140 : vector<1x32xf32> to vector<8x32xf32>
    %160 = arith.mulf %158, %159 : vector<8x32xf32>
    %161 = vector.broadcast %142 : vector<1x32xf32> to vector<8x32xf32>
    %162 = arith.addf %160, %161 : vector<8x32xf32>
    %163 = arith.truncf %162 : vector<8x32xf32> to vector<8x32xbf16>
    %c1 = arith.constant 1 : index
    %c0_77 = arith.constant 0 : index
    %c0_78 = arith.constant 0 : index
    %164 = vector.load %arg5[%c1, %c0_77, %c0_78] : memref<2x32x96xbf16, #tpu.memory_space<vmem>>, vector<1x32x96xbf16>
    %165 = vector.shape_cast %164 : vector<1x32x96xbf16> to vector<32x96xbf16>
    %cst_79 = arith.constant dense<0.000000e+00> : vector<8x96xf32>
    %166 = tpu.matmul %163, %165, %cst_79 {dimension_numbers = #tpu.dot_dimension_numbers<[1], [0], [0], [1], [0, 0, 1, 1], [], []>} : vector<8x32xbf16>, vector<32x96xbf16>, vector<8x96xf32> -> vector<8x96xf32>
    %c1_80 = arith.constant 1 : index
    %c0_81 = arith.constant 0 : index
    %c0_82 = arith.constant 0 : index
    %167 = vector.load %arg6[%c1_80, %c0_81, %c0_82] : memref<2x1x96xf32, #tpu.memory_space<vmem>>, vector<1x1x96xf32>
    %168 = vector.shape_cast %167 : vector<1x1x96xf32> to vector<1x96xf32>
    %169 = vector.broadcast %168 : vector<1x96xf32> to vector<8x96xf32>
    %170 = arith.addf %166, %169 : vector<8x96xf32>
    %171 = arith.truncf %170 : vector<8x96xf32> to vector<8x96xbf16>
    %172 = vector.extract_strided_slice %171 {offsets = [0, 0], sizes = [8, 16], strides = [1, 1]} : vector<8x96xbf16> to vector<8x16xbf16>
    %173 = vector.extract_strided_slice %171 {offsets = [0, 32], sizes = [8, 16], strides = [1, 1]} : vector<8x96xbf16> to vector<8x16xbf16>
    %174 = vector.extract_strided_slice %171 {offsets = [0, 64], sizes = [8, 16], strides = [1, 1]} : vector<8x96xbf16> to vector<8x16xbf16>
    %cst_83 = arith.constant dense<0.000000e+00> : vector<8x8xf32>
    %175 = tpu.matmul %172, %173, %cst_83 {dimension_numbers = #tpu.dot_dimension_numbers<[1], [1], [0], [0], [0, 0, 1, 0], [], []>} : vector<8x16xbf16>, vector<8x16xbf16>, vector<8x8xf32> -> vector<8x8xf32>
    %cst_84 = arith.constant 2.500000e-01 : f32
    %176 = vector.broadcast %cst_84 : f32 to vector<8x8xf32>
    %177 = arith.mulf %175, %176 : vector<8x8xf32>
    %178 = arith.addf %177, %27 : vector<8x8xf32>
    %cst_85 = arith.constant dense<0xFF800000> : vector<8xf32>
    %179 = vector.multi_reduction <maximumf>, %178, %cst_85 [1] : vector<8x8xf32> to vector<8xf32>
    %180 = vector.shape_cast %179 : vector<8xf32> to vector<8x1xf32>
    %181 = vector.broadcast %180 : vector<8x1xf32> to vector<8x8xf32>
    %182 = arith.subf %178, %181 : vector<8x8xf32>
    %183 = math.exp %182 : vector<8x8xf32>
    %cst_86 = arith.constant dense<0.000000e+00> : vector<8xf32>
    %184 = vector.multi_reduction <add>, %183, %cst_86 [1] : vector<8x8xf32> to vector<8xf32>
    %185 = vector.shape_cast %184 : vector<8xf32> to vector<8x1xf32>
    %186 = tpu.reciprocal %185 {approx = true} : vector<8x1xf32> -> vector<8x1xf32>
    %187 = vector.broadcast %186 : vector<8x1xf32> to vector<8x8xf32>
    %188 = arith.mulf %183, %187 : vector<8x8xf32>
    %189 = arith.truncf %188 : vector<8x8xf32> to vector<8x8xbf16>
    %cst_87 = arith.constant dense<0.000000e+00> : vector<8x16xf32>
    %190 = tpu.matmul %189, %174, %cst_87 {dimension_numbers = #tpu.dot_dimension_numbers<[1], [0], [0], [1], [0, 0, 1, 1], [], []>} : vector<8x8xbf16>, vector<8x16xbf16>, vector<8x16xf32> -> vector<8x16xf32>
    %191 = vector.extract_strided_slice %171 {offsets = [0, 16], sizes = [8, 16], strides = [1, 1]} : vector<8x96xbf16> to vector<8x16xbf16>
    %192 = vector.extract_strided_slice %171 {offsets = [0, 48], sizes = [8, 16], strides = [1, 1]} : vector<8x96xbf16> to vector<8x16xbf16>
    %193 = vector.extract_strided_slice %171 {offsets = [0, 80], sizes = [8, 16], strides = [1, 1]} : vector<8x96xbf16> to vector<8x16xbf16>
    %cst_88 = arith.constant dense<0.000000e+00> : vector<8x8xf32>
    %194 = tpu.matmul %191, %192, %cst_88 {dimension_numbers = #tpu.dot_dimension_numbers<[1], [1], [0], [0], [0, 0, 1, 0], [], []>} : vector<8x16xbf16>, vector<8x16xbf16>, vector<8x8xf32> -> vector<8x8xf32>
    %cst_89 = arith.constant 2.500000e-01 : f32
    %195 = vector.broadcast %cst_89 : f32 to vector<8x8xf32>
    %196 = arith.mulf %194, %195 : vector<8x8xf32>
    %197 = arith.addf %196, %27 : vector<8x8xf32>
    %cst_90 = arith.constant dense<0xFF800000> : vector<8xf32>
    %198 = vector.multi_reduction <maximumf>, %197, %cst_90 [1] : vector<8x8xf32> to vector<8xf32>
    %199 = vector.shape_cast %198 : vector<8xf32> to vector<8x1xf32>
    %200 = vector.broadcast %199 : vector<8x1xf32> to vector<8x8xf32>
    %201 = arith.subf %197, %200 : vector<8x8xf32>
    %202 = math.exp %201 : vector<8x8xf32>
    %cst_91 = arith.constant dense<0.000000e+00> : vector<8xf32>
    %203 = vector.multi_reduction <add>, %202, %cst_91 [1] : vector<8x8xf32> to vector<8xf32>
    %204 = vector.shape_cast %203 : vector<8xf32> to vector<8x1xf32>
    %205 = tpu.reciprocal %204 {approx = true} : vector<8x1xf32> -> vector<8x1xf32>
    %206 = vector.broadcast %205 : vector<8x1xf32> to vector<8x8xf32>
    %207 = arith.mulf %202, %206 : vector<8x8xf32>
    %208 = arith.truncf %207 : vector<8x8xf32> to vector<8x8xbf16>
    %cst_92 = arith.constant dense<0.000000e+00> : vector<8x16xf32>
    %209 = tpu.matmul %208, %193, %cst_92 {dimension_numbers = #tpu.dot_dimension_numbers<[1], [0], [0], [1], [0, 0, 1, 1], [], []>} : vector<8x8xbf16>, vector<8x16xbf16>, vector<8x16xf32> -> vector<8x16xf32>
    %210 = tpu.concatenate %190, %209 in 1 : vector<8x16xf32>, vector<8x16xf32> -> vector<8x32xf32>
    %211 = arith.truncf %210 : vector<8x32xf32> to vector<8x32xbf16>
    %c1_93 = arith.constant 1 : index
    %c0_94 = arith.constant 0 : index
    %c0_95 = arith.constant 0 : index
    %212 = vector.load %arg7[%c1_93, %c0_94, %c0_95] : memref<2x32x32xbf16, #tpu.memory_space<vmem>>, vector<1x32x32xbf16>
    %213 = vector.shape_cast %212 : vector<1x32x32xbf16> to vector<32x32xbf16>
    %cst_96 = arith.constant dense<0.000000e+00> : vector<8x32xf32>
    %214 = tpu.matmul %211, %213, %cst_96 {dimension_numbers = #tpu.dot_dimension_numbers<[1], [0], [0], [1], [0, 0, 1, 1], [], []>} : vector<8x32xbf16>, vector<32x32xbf16>, vector<8x32xf32> -> vector<8x32xf32>
    %c1_97 = arith.constant 1 : index
    %c0_98 = arith.constant 0 : index
    %c0_99 = arith.constant 0 : index
    %215 = vector.load %arg8[%c1_97, %c0_98, %c0_99] : memref<2x1x32xf32, #tpu.memory_space<vmem>>, vector<1x1x32xf32>
    %216 = vector.shape_cast %215 : vector<1x1x32xf32> to vector<1x32xf32>
    %217 = vector.broadcast %216 : vector<1x32xf32> to vector<8x32xf32>
    %218 = arith.addf %214, %217 : vector<8x32xf32>
    %219 = arith.addf %218, %162 : vector<8x32xf32>
    %c1_100 = arith.constant 1 : index
    %c0_101 = arith.constant 0 : index
    %c0_102 = arith.constant 0 : index
    %220 = vector.load %arg9[%c1_100, %c0_101, %c0_102] : memref<2x1x32xf32, #tpu.memory_space<vmem>>, vector<1x1x32xf32>
    %221 = vector.shape_cast %220 : vector<1x1x32xf32> to vector<1x32xf32>
    %c1_103 = arith.constant 1 : index
    %c0_104 = arith.constant 0 : index
    %c0_105 = arith.constant 0 : index
    %222 = vector.load %arg10[%c1_103, %c0_104, %c0_105] : memref<2x1x32xf32, #tpu.memory_space<vmem>>, vector<1x1x32xf32>
    %223 = vector.shape_cast %222 : vector<1x1x32xf32> to vector<1x32xf32>
    %cst_106 = arith.constant dense<0.000000e+00> : vector<8xf32>
    %224 = vector.multi_reduction <add>, %219, %cst_106 [1] : vector<8x32xf32> to vector<8xf32>
    %225 = vector.shape_cast %224 : vector<8xf32> to vector<8x1xf32>
    %cst_107 = arith.constant 3.200000e+01 : f32
    %226 = vector.broadcast %cst_107 : f32 to vector<8x1xf32>
    %227 = arith.divf %225, %226 : vector<8x1xf32>
    %228 = vector.broadcast %227 : vector<8x1xf32> to vector<8x32xf32>
    %229 = arith.subf %219, %228 : vector<8x32xf32>
    %230 = arith.mulf %229, %229 : vector<8x32xf32>
    %cst_108 = arith.constant dense<0.000000e+00> : vector<8xf32>
    %231 = vector.multi_reduction <add>, %230, %cst_108 [1] : vector<8x32xf32> to vector<8xf32>
    %232 = vector.shape_cast %231 : vector<8xf32> to vector<8x1xf32>
    %cst_109 = arith.constant 3.200000e+01 : f32
    %233 = vector.broadcast %cst_109 : f32 to vector<8x1xf32>
    %234 = arith.divf %232, %233 : vector<8x1xf32>
    %cst_110 = arith.constant 9.99999996E-13 : f32
    %235 = vector.broadcast %cst_110 : f32 to vector<8x1xf32>
    %236 = arith.addf %234, %235 : vector<8x1xf32>
    %237 = math.rsqrt %236 : vector<8x1xf32>
    %238 = vector.broadcast %237 : vector<8x1xf32> to vector<8x32xf32>
    %239 = arith.mulf %229, %238 : vector<8x32xf32>
    %240 = vector.broadcast %221 : vector<1x32xf32> to vector<8x32xf32>
    %241 = arith.mulf %239, %240 : vector<8x32xf32>
    %242 = vector.broadcast %223 : vector<1x32xf32> to vector<8x32xf32>
    %243 = arith.addf %241, %242 : vector<8x32xf32>
    %244 = arith.truncf %243 : vector<8x32xf32> to vector<8x32xbf16>
    %c1_111 = arith.constant 1 : index
    %c0_112 = arith.constant 0 : index
    %c0_113 = arith.constant 0 : index
    %245 = vector.load %arg11[%c1_111, %c0_112, %c0_113] : memref<2x32x64xbf16, #tpu.memory_space<vmem>>, vector<1x32x64xbf16>
    %246 = vector.shape_cast %245 : vector<1x32x64xbf16> to vector<32x64xbf16>
    %cst_114 = arith.constant dense<0.000000e+00> : vector<8x64xf32>
    %247 = tpu.matmul %244, %246, %cst_114 {dimension_numbers = #tpu.dot_dimension_numbers<[1], [0], [0], [1], [0, 0, 1, 1], [], []>} : vector<8x32xbf16>, vector<32x64xbf16>, vector<8x64xf32> -> vector<8x64xf32>
    %c1_115 = arith.constant 1 : index
    %c0_116 = arith.constant 0 : index
    %c0_117 = arith.constant 0 : index
    %248 = vector.load %arg12[%c1_115, %c0_116, %c0_117] : memref<2x1x64xf32, #tpu.memory_space<vmem>>, vector<1x1x64xf32>
    %249 = vector.shape_cast %248 : vector<1x1x64xf32> to vector<1x64xf32>
    %250 = vector.broadcast %249 : vector<1x64xf32> to vector<8x64xf32>
    %251 = arith.addf %247, %250 : vector<8x64xf32>
    %cst_118 = arith.constant 5.000000e-01 : f32
    %252 = vector.broadcast %cst_118 : f32 to vector<8x64xf32>
    %253 = arith.mulf %252, %251 : vector<8x64xf32>
    %cst_119 = arith.constant 4.471500e-02 : f32
    %254 = vector.broadcast %cst_119 : f32 to vector<8x64xf32>
    %255 = arith.mulf %254, %251 : vector<8x64xf32>
    %256 = arith.mulf %255, %251 : vector<8x64xf32>
    %257 = arith.mulf %256, %251 : vector<8x64xf32>
    %258 = arith.addf %251, %257 : vector<8x64xf32>
    %cst_120 = arith.constant 0.797884583 : f32
    %259 = vector.broadcast %cst_120 : f32 to vector<8x64xf32>
    %260 = arith.mulf %259, %258 : vector<8x64xf32>
    %261 = math.tanh %260 : vector<8x64xf32>
    %cst_121 = arith.constant 1.000000e+00 : f32
    %262 = vector.broadcast %cst_121 : f32 to vector<8x64xf32>
    %263 = arith.addf %262, %261 : vector<8x64xf32>
    %264 = arith.mulf %253, %263 : vector<8x64xf32>
    %265 = arith.truncf %264 : vector<8x64xf32> to vector<8x64xbf16>
    %c1_122 = arith.constant 1 : index
    %c0_123 = arith.constant 0 : index
    %c0_124 = arith.constant 0 : index
    %266 = vector.load %arg13[%c1_122, %c0_123, %c0_124] : memref<2x64x32xbf16, #tpu.memory_space<vmem>>, vector<1x64x32xbf16>
    %267 = vector.shape_cast %266 : vector<1x64x32xbf16> to vector<64x32xbf16>
    %cst_125 = arith.constant dense<0.000000e+00> : vector<8x32xf32>
    %268 = tpu.matmul %265, %267, %cst_125 {dimension_numbers = #tpu.dot_dimension_numbers<[1], [0], [0], [1], [0, 0, 1, 1], [], []>} : vector<8x64xbf16>, vector<64x32xbf16>, vector<8x32xf32> -> vector<8x32xf32>
    %c1_126 = arith.constant 1 : index
    %c0_127 = arith.constant 0 : index
    %c0_128 = arith.constant 0 : index
    %269 = vector.load %arg14[%c1_126, %c0_127, %c0_128] : memref<2x1x32xf32, #tpu.memory_space<vmem>>, vector<1x1x32xf32>
    %270 = vector.shape_cast %269 : vector<1x1x32xf32> to vector<1x32xf32>
    %271 = vector.broadcast %270 : vector<1x32xf32> to vector<8x32xf32>
    %272 = arith.addf %268, %271 : vector<8x32xf32>
    %273 = arith.addf %272, %243 : vector<8x32xf32>
    %c1_129 = arith.constant 1 : index
    %c0_130 = arith.constant 0 : index
    %c0_131 = arith.constant 0 : index
    %274 = vector.load %arg15[%c1_129, %c0_130, %c0_131] : memref<2x1x32xf32, #tpu.memory_space<vmem>>, vector<1x1x32xf32>
    %275 = vector.shape_cast %274 : vector<1x1x32xf32> to vector<1x32xf32>
    %c1_132 = arith.constant 1 : index
    %c0_133 = arith.constant 0 : index
    %c0_134 = arith.constant 0 : index
    %276 = vector.load %arg16[%c1_132, %c0_133, %c0_134] : memref<2x1x32xf32, #tpu.memory_space<vmem>>, vector<1x1x32xf32>
    %277 = vector.shape_cast %276 : vector<1x1x32xf32> to vector<1x32xf32>
    %cst_135 = arith.constant dense<0.000000e+00> : vector<8xf32>
    %278 = vector.multi_reduction <add>, %273, %cst_135 [1] : vector<8x32xf32> to vector<8xf32>
    %279 = vector.shape_cast %278 : vector<8xf32> to vector<8x1xf32>
    %cst_136 = arith.constant 3.200000e+01 : f32
    %280 = vector.broadcast %cst_136 : f32 to vector<8x1xf32>
    %281 = arith.divf %279, %280 : vector<8x1xf32>
    %282 = vector.broadcast %281 : vector<8x1xf32> to vector<8x32xf32>
    %283 = arith.subf %273, %282 : vector<8x32xf32>
    %284 = arith.mulf %283, %283 : vector<8x32xf32>
    %cst_137 = arith.constant dense<0.000000e+00> : vector<8xf32>
    %285 = vector.multi_reduction <add>, %284, %cst_137 [1] : vector<8x32xf32> to vector<8xf32>
    %286 = vector.shape_cast %285 : vector<8xf32> to vector<8x1xf32>
    %cst_138 = arith.constant 3.200000e+01 : f32
    %287 = vector.broadcast %cst_138 : f32 to vector<8x1xf32>
    %288 = arith.divf %286, %287 : vector<8x1xf32>
    %cst_139 = arith.constant 9.99999996E-13 : f32
    %289 = vector.broadcast %cst_139 : f32 to vector<8x1xf32>
    %290 = arith.addf %288, %289 : vector<8x1xf32>
    %291 = math.rsqrt %290 : vector<8x1xf32>
    %292 = vector.broadcast %291 : vector<8x1xf32> to vector<8x32xf32>
    %293 = arith.mulf %283, %292 : vector<8x32xf32>
    %294 = vector.broadcast %275 : vector<1x32xf32> to vector<8x32xf32>
    %295 = arith.mulf %293, %294 : vector<8x32xf32>
    %296 = vector.broadcast %277 : vector<1x32xf32> to vector<8x32xf32>
    %297 = arith.addf %295, %296 : vector<8x32xf32>
    %298 = arith.truncf %297 : vector<8x32xf32> to vector<8x32xbf16>
    %c0_140 = arith.constant 0 : index
    %c0_141 = arith.constant 0 : index
    %299 = vector.load %arg17[%c0_140, %c0_141] : memref<32x128xbf16, #tpu.memory_space<vmem>>, vector<32x128xbf16>
    %cst_142 = arith.constant dense<0.000000e+00> : vector<8x128xf32>
    %300 = tpu.matmul %298, %299, %cst_142 {dimension_numbers = #tpu.dot_dimension_numbers<[1], [0], [0], [1], [0, 0, 1, 1], [], []>} : vector<8x32xbf16>, vector<32x128xbf16>, vector<8x128xf32> -> vector<8x128xf32>
    %c0_143 = arith.constant 0 : index
    %c0_144 = arith.constant 0 : index
    %301 = vector.load %arg18[%c0_143, %c0_144] : memref<1x128xf32, #tpu.memory_space<vmem>>, vector<1x128xf32>
    %302 = vector.broadcast %301 : vector<1x128xf32> to vector<8x128xf32>
    %303 = arith.addf %300, %302 : vector<8x128xf32>
    %c0_145 = arith.constant 0 : index
    %c0_146 = arith.constant 0 : index
    %c0_147 = arith.constant 0 : index
    %304 = vector.load %arg19[%c0_145, %c0_146, %c0_147] : memref<1x8x128xf32, #tpu.memory_space<vmem>>, vector<1x8x128xf32>
    %305 = vector.shape_cast %304 : vector<1x8x128xf32> to vector<8x128xf32>
    %306 = vector.shape_cast %303 : vector<8x128xf32> to vector<1x8x128xf32>
    tpu.vector_store %arg19[%c0_145, %c0_146, %c0_147], %306 {strides = array<i32>} : memref<1x8x128xf32, #tpu.memory_space<vmem>>, vector<1x8x128xf32>,
    return
  }
  func.func @transform_0(%arg0: i32) -> (i32, i32, i32) {
    %c0_i32 = arith.constant 0 : i32
    %c0_i32_0 = arith.constant 0 : i32
    %c0_i32_1 = arith.constant 0 : i32
    return %arg0, %c0_i32, %c0_i32_0 : i32, i32, i32
  }
  func.func @transform_1(%arg0: i32) -> (i32, i32, i32) {
    %c0_i32 = arith.constant 0 : i32
    %c0_i32_0 = arith.constant 0 : i32
    %c0_i32_1 = arith.constant 0 : i32
    return %arg0, %c0_i32, %c0_i32_0 : i32, i32, i32
  }
  func.func @transform_2(%arg0: i32) -> (i32, i32) {
    %c0_i32 = arith.constant 0 : i32
    %c0_i32_0 = arith.constant 0 : i32
    %c0_i32_1 = arith.constant 0 : i32
    return %c0_i32, %c0_i32_0 : i32, i32
  }
  func.func @transform_3(%arg0: i32) -> (i32, i32) {
    %c0_i32 = arith.constant 0 : i32
    %c0_i32_0 = arith.constant 0 : i32
    %c0_i32_1 = arith.constant 0 : i32
    return %c0_i32, %c0_i32_0 : i32, i32
  }
  func.func @transform_4(%arg0: i32) -> (i32, i32, i32) {
    %c0_i32 = arith.constant 0 : i32
    %c0_i32_0 = arith.constant 0 : i32
    %c0_i32_1 = arith.constant 0 : i32
    %c0_i32_2 = arith.constant 0 : i32
    return %c0_i32, %c0_i32_0, %c0_i32_1 : i32, i32, i32
  }
  func.func @transform_5(%arg0: i32) -> (i32, i32, i32) {
    %c0_i32 = arith.constant 0 : i32
    %c0_i32_0 = arith.constant 0 : i32
    %c0_i32_1 = arith.constant 0 : i32
    %c0_i32_2 = arith.constant 0 : i32
    return %c0_i32, %c0_i32_0, %c0_i32_1 : i32, i32, i32
  }
  func.func @transform_6(%arg0: i32) -> (i32, i32, i32) {
    %c0_i32 = arith.constant 0 : i32
    %c0_i32_0 = arith.constant 0 : i32
    %c0_i32_1 = arith.constant 0 : i32
    %c0_i32_2 = arith.constant 0 : i32
    return %c0_i32, %c0_i32_0, %c0_i32_1 : i32, i32, i32
  }
  func.func @transform_7(%arg0: i32) -> (i32, i32, i32) {
    %c0_i32 = arith.constant 0 : i32
    %c0_i32_0 = arith.constant 0 : i32
    %c0_i32_1 = arith.constant 0 : i32
    %c0_i32_2 = arith.constant 0 : i32
    return %c0_i32, %c0_i32_0, %c0_i32_1 : i32, i32, i32
  }
  func.func @transform_8(%arg0: i32) -> (i32, i32, i32) {
    %c0_i32 = arith.constant 0 : i32
    %c0_i32_0 = arith.constant 0 : i32
    %c0_i32_1 = arith.constant 0 : i32
    %c0_i32_2 = arith.constant 0 : i32
    return %c0_i32, %c0_i32_0, %c0_i32_1 : i32, i32, i32
  }
  func.func @transform_9(%arg0: i32) -> (i32, i32, i32) {
    %c0_i32 = arith.constant 0 : i32
    %c0_i32_0 = arith.constant 0 : i32
    %c0_i32_1 = arith.constant 0 : i32
    %c0_i32_2 = arith.constant 0 : i32
    return %c0_i32, %c0_i32_0, %c0_i32_1 : i32, i32, i32
  }
  func.func @transform_10(%arg0: i32) -> (i32, i32, i32) {
    %c0_i32 = arith.constant 0 : i32
    %c0_i32_0 = arith.constant 0 : i32
    %c0_i32_1 = arith.constant 0 : i32
    %c0_i32_2 = arith.constant 0 : i32
    return %c0_i32, %c0_i32_0, %c0_i32_1 : i32, i32, i32
  }
  func.func @transform_11(%arg0: i32) -> (i32, i32, i32) {
    %c0_i32 = arith.constant 0 : i32
    %c0_i32_0 = arith.constant 0 : i32
    %c0_i32_1 = arith.constant 0 : i32
    %c0_i32_2 = arith.constant 0 : i32
    return %c0_i32, %c0_i32_0, %c0_i32_1 : i32, i32, i32
  }
  func.func @transform_12(%arg0: i32) -> (i32, i32, i32) {
    %c0_i32 = arith.constant 0 : i32
    %c0_i32_0 = arith.constant 0 : i32
    %c0_i32_1 = arith.constant 0 : i32
    %c0_i32_2 = arith.constant 0 : i32
    return %c0_i32, %c0_i32_0, %c0_i32_1 : i32, i32, i32
  }
  func.func @transform_13(%arg0: i32) -> (i32, i32, i32) {
    %c0_i32 = arith.constant 0 : i32
    %c0_i32_0 = arith.constant 0 : i32
    %c0_i32_1 = arith.constant 0 : i32
    %c0_i32_2 = arith.constant 0 : i32
    return %c0_i32, %c0_i32_0, %c0_i32_1 : i32, i32, i32
  }
  func.func @transform_14(%arg0: i32) -> (i32, i32, i32) {
    %c0_i32 = arith.constant 0 : i32
    %c0_i32_0 = arith.constant 0 : i32
    %c0_i32_1 = arith.constant 0 : i32
    %c0_i32_2 = arith.constant 0 : i32
    return %c0_i32, %c0_i32_0, %c0_i32_1 : i32, i32, i32
  }
  func.func @transform_15(%arg0: i32) -> (i32, i32, i32) {
    %c0_i32 = arith.constant 0 : i32
    %c0_i32_0 = arith.constant 0 : i32
    %c0_i32_1 = arith.constant 0 : i32
    %c0_i32_2 = arith.constant 0 : i32
    return %c0_i32, %c0_i32_0, %c0_i32_1 : i32, i32, i32
  }
  func.func @transform_16(%arg0: i32) -> (i32, i32) {
    %c0_i32 = arith.constant 0 : i32
    %c0_i32_0 = arith.constant 0 : i32
    %c0_i32_1 = arith.constant 0 : i32
    return %c0_i32, %c0_i32_0 : i32, i32
  }
  func.func @transform_17(%arg0: i32) -> (i32, i32) {
    %c0_i32 = arith.constant 0 : i32
    %c0_i32_0 = arith.constant 0 : i32
    %c0_i32_1 = arith.constant 0 : i32
    return %c0_i32, %c0_i32_0 : i32, i32
  }
  func.func @transform_18(%arg0: i32) -> (i32, i32, i32) {
    %c0_i32 = arith.constant 0 : i32
    %c0_i32_0 = arith.constant 0 : i32
    %c0_i32_1 = arith.constant 0 : i32
    return %arg0, %c0_i32, %c0_i32_0 : i32, i32, i32
  }
}

</mosaic_0001>

<llo_original>
// kernel: ner_forward.1
$region0: #{ner_forward.1}
  #allocation0 [shape = 'u32[]', space=smem, size = 0x4, offset = 0x4, fixed_abs, tag = 'smem constant byte address 0x4 - core index']
  #allocation1 [shape = 'u32[144,128]{1,0:T(1,128)}', space=vmem, size = 0x12000, scoped, tag = 'internal scratch']
  %s0 = inlined_call_operand.vmem [shape: f32[2,8,32], index: 0, kind: input, shape index: {}]
  %s1 = inlined_call_operand.vmem [shape: f32[2,1,8], index: 1, kind: input, shape index: {}]
  %s2 = inlined_call_operand.vmem [shape: f32[1,32], index: 2, kind: input, shape index: {}]
  %s3 = inlined_call_operand.vmem [shape: f32[1,32], index: 3, kind: input, shape index: {}]
  %s4 = inlined_call_operand.vmem [shape: bf16[2,32,96], index: 4, kind: input, shape index: {}]
  %s5 = inlined_call_operand.vmem [shape: f32[2,1,96], index: 5, kind: input, shape index: {}]
  %s6 = inlined_call_operand.vmem [shape: bf16[2,32,32], index: 6, kind: input, shape index: {}]
  %s7 = inlined_call_operand.vmem [shape: f32[2,1,32], index: 7, kind: input, shape index: {}]
  %s8 = inlined_call_operand.vmem [shape: f32[2,1,32], index: 8, kind: input, shape index: {}]
  %s9 = inlined_call_operand.vmem [shape: f32[2,1,32], index: 9, kind: input, shape index: {}]
  %s10 = inlined_call_operand.vmem [shape: bf16[2,32,64], index: 10, kind: input, shape index: {}]
  %s11 = inlined_call_operand.vmem [shape: f32[2,1,64], index: 11, kind: input, shape index: {}]
  %s12 = inlined_call_operand.vmem [shape: bf16[2,64,32], index: 12, kind: input, shape index: {}]
  %s13 = inlined_call_operand.vmem [shape: f32[2,1,32], index: 13, kind: input, shape index: {}]
  %s14 = inlined_call_operand.vmem [shape: f32[2,1,32], index: 14, kind: input, shape index: {}]
  %s15 = inlined_call_operand.vmem [shape: f32[2,1,32], index: 15, kind: input, shape index: {}]
  %s16 = inlined_call_operand.vmem [shape: bf16[32,128], index: 16, kind: input, shape index: {}]
  %s17 = inlined_call_operand.vmem [shape: f32[1,128], index: 17, kind: input, shape index: {}]
  %s18 = inlined_call_operand.hbm [shape: f32[2,8,128], index: 18, kind: output, shape index: {}]
  %s19 = sld [smem:[#allocation0]]
  $region105: #{ner_forward.1} parent=0
    _
  %s21 = ssub.s32 1, %s19
  %s22 = scalar_select 0, %s21, %s19
  $region1: #{ner_forward.1} parent=0
    #allocation2 [shape = 'u8[8192]{0}', space=vmem, size = 0x2000, scoped, tag = 'output window, operand 0']
    #allocation3 [shape = 's32[2]{0}', space=sflag, size = 0x8, scoped, tag = 'scoped memory for ner_forward.1']
    %23 = vsyncpa [#allocation3], 0
    %s24 = scalar_lea.sflag [#allocation3], 1
    %25 = vsyncpa %s24, 0
    loop: start=0, step=1, limit=4
    $region2: #{ner_forward.1} parent=1 // loop_pre_header
      _
    $region3: #{ner_forward.1} parent=1 // loop_header
      %s27 = sphi 0, %s31
      %p28 = scmp.ge.s32.totalorder %s27, 4
      %s37 = sphi 0, %s39
      %s40 = sphi 0, %s37
      %s41 = sphi 0, %s40
      %s57 = sphi 0, %s41
      %s63 = sphi 0, %s65
      %s66 = sphi 0, %s63
      %s67 = sphi 0, %s66
      %s83 = sphi 0, %s67
      %s87 = sphi 0, %s87
      %s89 = sphi 0, %s87
      %s90 = sphi 0, %s89
      %s104 = sphi 0, %s90
      %s108 = sphi 0, %s108
      %s110 = sphi 0, %s108
      %s111 = sphi 0, %s110
      %s125 = sphi 0, %s111
      %s129 = sphi 0, %s129
      %s131 = sphi 0, %s129
      %s132 = sphi 0, %s131
      %s146 = sphi 0, %s132
      %s150 = sphi 0, %s150
      %s152 = sphi 0, %s150
      %s153 = sphi 0, %s152
      %s167 = sphi 0, %s153
      %s171 = sphi 0, %s171
      %s173 = sphi 0, %s171
      %s174 = sphi 0, %s173
      %s188 = sphi 0, %s174
      %s192 = sphi 0, %s192
      %s194 = sphi 0, %s192
      %s195 = sphi 0, %s194
      %s209 = sphi 0, %s195
      %s213 = sphi 0, %s213
      %s215 = sphi 0, %s213
      %s216 = sphi 0, %s215
      %s230 = sphi 0, %s216
      %s234 = sphi 0, %s234
      %s236 = sphi 0, %s234
      %s237 = sphi 0, %s236
      %s251 = sphi 0, %s237
      %s255 = sphi 0, %s255
      %s257 = sphi 0, %s255
      %s258 = sphi 0, %s257
      %s272 = sphi 0, %s258
      %s276 = sphi 0, %s276
      %s278 = sphi 0, %s276
      %s279 = sphi 0, %s278
      %s293 = sphi 0, %s279
      %s297 = sphi 0, %s297
      %s299 = sphi 0, %s297
      %s300 = sphi 0, %s299
      %s314 = sphi 0, %s300
      %s318 = sphi 0, %s318
      %s320 = sphi 0, %s318
      %s321 = sphi 0, %s320
      %s335 = sphi 0, %s321
      %s339 = sphi 0, %s339
      %s341 = sphi 0, %s339
      %s342 = sphi 0, %s341
      %s356 = sphi 0, %s342
      %s360 = sphi 0, %s360
      %s362 = sphi 0, %s360
      %s363 = sphi 0, %s362
      %s377 = sphi 0, %s363
      %s381 = sphi 0, %s381
      %s383 = sphi 0, %s381
      %s384 = sphi 0, %s383
      %s398 = sphi 0, %s384
      %s402 = sphi 0, %s402
      %s404 = sphi 0, %s402
      %s405 = sphi 0, %s404
      %s419 = sphi 0, %s405
      %s425 = sphi 0, %s427
      %s428 = sphi 0, %s425
      %s429 = sphi 0, %s428
      %s445 = sphi 0, %s429
    $region4: #{ner_forward.1} parent=1 // loop_header_branch
      %30 = sbr.rel (%p28) target = $region8
    $region5: #{ner_forward.1} parent=1 // loop_body
      %s32 = ssub.s32 %s27, 1
      %s33 = ssub.s32 %s27, 2
      %s34 = sadd.s32 %s27, 1
      %s35 = ssub.s32 %s27, %s34
      %p36 = scmp.eq.s32.totalorder %s35, 0
      %s38 = sadd.s32 %s37, 1
      %s39 = scalar_select %p36, %s37, %s38
      %p42 = pneg %p36
      %p43 = scmp.eq.s32.totalorder %s27, 1
      %p44 = por %p42, %p43
      %p45 = scmp.ne.s32.totalorder %s37, %s40
      %p46 = scmp.eq.s32.totalorder %s27, 0
      %p47 = por %p45, %p46
      %p48 = scmp.ne.s32.totalorder %s37, %s40
      %p49 = scmp.eq.s32.totalorder %s32, 1
      %p50 = por %p48, %p49
      %p51 = scmp.ne.s32.totalorder %s40, %s41
      %p52 = scmp.eq.s32.totalorder %s32, 0
      %p53 = por %p51, %p52
      %p54 = scmp.ne.s32.totalorder %s40, %s41
      %p55 = scmp.eq.s32.totalorder %s33, 1
      %p56 = por %p54, %p55
      %p58 = scmp.ne.s32.totalorder %s41, %s57
      %p59 = scmp.eq.s32.totalorder %s33, 0
      %p60 = por %p58, %p59
      %s61 = ssub.s32 %s27, %s34
      %p62 = scmp.eq.s32.totalorder %s61, 0
      %s64 = sadd.s32 %s63, 1
      %s65 = scalar_select %p62, %s63, %s64
      %p68 = pneg %p62
      %p69 = scmp.eq.s32.totalorder %s27, 1
      %p70 = por %p68, %p69
      %p71 = scmp.ne.s32.totalorder %s63, %s66
      %p72 = scmp.eq.s32.totalorder %s27, 0
      %p73 = por %p71, %p72
      %p74 = scmp.ne.s32.totalorder %s63, %s66
      %p75 = scmp.eq.s32.totalorder %s32, 1
      %p76 = por %p74, %p75
      %p77 = scmp.ne.s32.totalorder %s66, %s67
      %p78 = scmp.eq.s32.totalorder %s32, 0
      %p79 = por %p77, %p78
      %p80 = scmp.ne.s32.totalorder %s66, %s67
      %p81 = scmp.eq.s32.totalorder %s33, 1
      %p82 = por %p80, %p81
      %p84 = scmp.ne.s32.totalorder %s67, %s83
      %p85 = scmp.eq.s32.totalorder %s33, 0
      %p86 = por %p84, %p85
      %s88 = sadd.s32 %s87, 1
      %p91 = scmp.eq.s32.totalorder %s27, 1
      %p92 = scmp.ne.s32.totalorder %s87, %s89
      %p93 = scmp.eq.s32.totalorder %s27, 0
      %p94 = por %p92, %p93
      %p95 = scmp.ne.s32.totalorder %s87, %s89
      %p96 = scmp.eq.s32.totalorder %s32, 1
      %p97 = por %p95, %p96
      %p98 = scmp.ne.s32.totalorder %s89, %s90
      %p99 = scmp.eq.s32.totalorder %s32, 0
      %p100 = por %p98, %p99
      %p101 = scmp.ne.s32.totalorder %s89, %s90
      %p102 = scmp.eq.s32.totalorder %s33, 1
      %p103 = por %p101, %p102
      %p105 = scmp.ne.s32.totalorder %s90, %s104
      %p106 = scmp.eq.s32.totalorder %s33, 0
      %p107 = por %p105, %p106
      %s109 = sadd.s32 %s108, 1
      %p112 = scmp.eq.s32.totalorder %s27, 1
      %p113 = scmp.ne.s32.totalorder %s108, %s110
      %p114 = scmp.eq.s32.totalorder %s27, 0
      %p115 = por %p113, %p114
      %p116 = scmp.ne.s32.totalorder %s108, %s110
      %p117 = scmp.eq.s32.totalorder %s32, 1
      %p118 = por %p116, %p117
      %p119 = scmp.ne.s32.totalorder %s110, %s111
      %p120 = scmp.eq.s32.totalorder %s32, 0
      %p121 = por %p119, %p120
      %p122 = scmp.ne.s32.totalorder %s110, %s111
      %p123 = scmp.eq.s32.totalorder %s33, 1
      %p124 = por %p122, %p123
      %p126 = scmp.ne.s32.totalorder %s111, %s125
      %p127 = scmp.eq.s32.totalorder %s33, 0
      %p128 = por %p126, %p127
      %s130 = sadd.s32 %s129, 1
      %p133 = scmp.eq.s32.totalorder %s27, 1
      %p134 = scmp.ne.s32.totalorder %s129, %s131
      %p135 = scmp.eq.s32.totalorder %s27, 0
      %p136 = por %p134, %p135
      %p137 = scmp.ne.s32.totalorder %s129, %s131
      %p138 = scmp.eq.s32.totalorder %s32, 1
      %p139 = por %p137, %p138
      %p140 = scmp.ne.s32.totalorder %s131, %s132
      %p141 = scmp.eq.s32.totalorder %s32, 0
      %p142 = por %p140, %p141
      %p143 = scmp.ne.s32.totalorder %s131, %s132
      %p144 = scmp.eq.s32.totalorder %s33, 1
      %p145 = por %p143, %p144
      %p147 = scmp.ne.s32.totalorder %s132, %s146
      %p148 = scmp.eq.s32.totalorder %s33, 0
      %p149 = por %p147, %p148
      %s151 = sadd.s32 %s150, 1
      %p154 = scmp.eq.s32.totalorder %s27, 1
      %p155 = scmp.ne.s32.totalorder %s150, %s152
      %p156 = scmp.eq.s32.totalorder %s27, 0
      %p157 = por %p155, %p156
      %p158 = scmp.ne.s32.totalorder %s150, %s152
      %p159 = scmp.eq.s32.totalorder %s32, 1
      %p160 = por %p158, %p159
      %p161 = scmp.ne.s32.totalorder %s152, %s153
      %p162 = scmp.eq.s32.totalorder %s32, 0
      %p163 = por %p161, %p162
      %p164 = scmp.ne.s32.totalorder %s152, %s153
      %p165 = scmp.eq.s32.totalorder %s33, 1
      %p166 = por %p164, %p165
      %p168 = scmp.ne.s32.totalorder %s153, %s167
      %p169 = scmp.eq.s32.totalorder %s33, 0
      %p170 = por %p168, %p169
      %s172 = sadd.s32 %s171, 1
      %p175 = scmp.eq.s32.totalorder %s27, 1
      %p176 = scmp.ne.s32.totalorder %s171, %s173
      %p177 = scmp.eq.s32.totalorder %s27, 0
      %p178 = por %p176, %p177
      %p179 = scmp.ne.s32.totalorder %s171, %s173
      %p180 = scmp.eq.s32.totalorder %s32, 1
      %p181 = por %p179, %p180
      %p182 = scmp.ne.s32.totalorder %s173, %s174
      %p183 = scmp.eq.s32.totalorder %s32, 0
      %p184 = por %p182, %p183
      %p185 = scmp.ne.s32.totalorder %s173, %s174
      %p186 = scmp.eq.s32.totalorder %s33, 1
      %p187 = por %p185, %p186
      %p189 = scmp.ne.s32.totalorder %s174, %s188
      %p190 = scmp.eq.s32.totalorder %s33, 0
      %p191 = por %p189, %p190
      %s193 = sadd.s32 %s192, 1
      %p196 = scmp.eq.s32.totalorder %s27, 1
      %p197 = scmp.ne.s32.totalorder %s192, %s194
      %p198 = scmp.eq.s32.totalorder %s27, 0
      %p199 = por %p197, %p198
      %p200 = scmp.ne.s32.totalorder %s192, %s194
      %p201 = scmp.eq.s32.totalorder %s32, 1
      %p202 = por %p200, %p201
      %p203 = scmp.ne.s32.totalorder %s194, %s195
      %p204 = scmp.eq.s32.totalorder %s32, 0
      %p205 = por %p203, %p204
      %p206 = scmp.ne.s32.totalorder %s194, %s195
      %p207 = scmp.eq.s32.totalorder %s33, 1
      %p208 = por %p206, %p207
      %p210 = scmp.ne.s32.totalorder %s195, %s209
      %p211 = scmp.eq.s32.totalorder %s33, 0
      %p212 = por %p210, %p211
      %s214 = sadd.s32 %s213, 1
      %p217 = scmp.eq.s32.totalorder %s27, 1
      %p218 = scmp.ne.s32.totalorder %s213, %s215
      %p219 = scmp.eq.s32.totalorder %s27, 0
      %p220 = por %p218, %p219
      %p221 = scmp.ne.s32.totalorder %s213, %s215
      %p222 = scmp.eq.s32.totalorder %s32, 1
      %p223 = por %p221, %p222
      %p224 = scmp.ne.s32.totalorder %s215, %s216
      %p225 = scmp.eq.s32.totalorder %s32, 0
      %p226 = por %p224, %p225
      %p227 = scmp.ne.s32.totalorder %s215, %s216
      %p228 = scmp.eq.s32.totalorder %s33, 1
      %p229 = por %p227, %p228
      %p231 = scmp.ne.s32.totalorder %s216, %s230
      %p232 = scmp.eq.s32.totalorder %s33, 0
      %p233 = por %p231, %p232
      %s235 = sadd.s32 %s234, 1
      %p238 = scmp.eq.s32.totalorder %s27, 1
      %p239 = scmp.ne.s32.totalorder %s234, %s236
      %p240 = scmp.eq.s32.totalorder %s27, 0
      %p241 = por %p239, %p240
      %p242 = scmp.ne.s32.totalorder %s234, %s236
      %p243 = scmp.eq.s32.totalorder %s32, 1
      %p244 = por %p242, %p243
      %p245 = scmp.ne.s32.totalorder %s236, %s237
      %p246 = scmp.eq.s32.totalorder %s32, 0
      %p247 = por %p245, %p246
      %p248 = scmp.ne.s32.totalorder %s236, %s237
      %p249 = scmp.eq.s32.totalorder %s33, 1
      %p250 = por %p248, %p249
      %p252 = scmp.ne.s32.totalorder %s237, %s251
      %p253 = scmp.eq.s32.totalorder %s33, 0
      %p254 = por %p252, %p253
      %s256 = sadd.s32 %s255, 1
      %p259 = scmp.eq.s32.totalorder %s27, 1
      %p260 = scmp.ne.s32.totalorder %s255, %s257
      %p261 = scmp.eq.s32.totalorder %s27, 0
      %p262 = por %p260, %p261
      %p263 = scmp.ne.s32.totalorder %s255, %s257
      %p264 = scmp.eq.s32.totalorder %s32, 1
      %p265 = por %p263, %p264
      %p266 = scmp.ne.s32.totalorder %s257, %s258
      %p267 = scmp.eq.s32.totalorder %s32, 0
      %p268 = por %p266, %p267
      %p269 = scmp.ne.s32.totalorder %s257, %s258
      %p270 = scmp.eq.s32.totalorder %s33, 1
      %p271 = por %p269, %p270
      %p273 = scmp.ne.s32.totalorder %s258, %s272
      %p274 = scmp.eq.s32.totalorder %s33, 0
      %p275 = por %p273, %p274
      %s277 = sadd.s32 %s276, 1
      %p280 = scmp.eq.s32.totalorder %s27, 1
      %p281 = scmp.ne.s32.totalorder %s276, %s278
      %p282 = scmp.eq.s32.totalorder %s27, 0
      %p283 = por %p281, %p282
      %p284 = scmp.ne.s32.totalorder %s276, %s278
      %p285 = scmp.eq.s32.totalorder %s32, 1
      %p286 = por %p284, %p285
      %p287 = scmp.ne.s32.totalorder %s278, %s279
      %p288 = scmp.eq.s32.totalorder %s32, 0
      %p289 = por %p287, %p288
      %p290 = scmp.ne.s32.totalorder %s278, %s279
      %p291 = scmp.eq.s32.totalorder %s33, 1
      %p292 = por %p290, %p291
      %p294 = scmp.ne.s32.totalorder %s279, %s293
      %p295 = scmp.eq.s32.totalorder %s33, 0
      %p296 = por %p294, %p295
      %s298 = sadd.s32 %s297, 1
      %p301 = scmp.eq.s32.totalorder %s27, 1
      %p302 = scmp.ne.s32.totalorder %s297, %s299
      %p303 = scmp.eq.s32.totalorder %s27, 0
      %p304 = por %p302, %p303
      %p305 = scmp.ne.s32.totalorder %s297, %s299
      %p306 = scmp.eq.s32.totalorder %s32, 1
      %p307 = por %p305, %p306
      %p308 = scmp.ne.s32.totalorder %s299, %s300
      %p309 = scmp.eq.s32.totalorder %s32, 0
      %p310 = por %p308, %p309
      %p311 = scmp.ne.s32.totalorder %s299, %s300
      %p312 = scmp.eq.s32.totalorder %s33, 1
      %p313 = por %p311, %p312
      %p315 = scmp.ne.s32.totalorder %s300, %s314
      %p316 = scmp.eq.s32.totalorder %s33, 0
      %p317 = por %p315, %p316
      %s319 = sadd.s32 %s318, 1
      %p322 = scmp.eq.s32.totalorder %s27, 1
      %p323 = scmp.ne.s32.totalorder %s318, %s320
      %p324 = scmp.eq.s32.totalorder %s27, 0
      %p325 = por %p323, %p324
      %p326 = scmp.ne.s32.totalorder %s318, %s320
      %p327 = scmp.eq.s32.totalorder %s32, 1
      %p328 = por %p326, %p327
      %p329 = scmp.ne.s32.totalorder %s320, %s321
      %p330 = scmp.eq.s32.totalorder %s32, 0
      %p331 = por %p329, %p330
      %p332 = scmp.ne.s32.totalorder %s320, %s321
      %p333 = scmp.eq.s32.totalorder %s33, 1
      %p334 = por %p332, %p333
      %p336 = scmp.ne.s32.totalorder %s321, %s335
      %p337 = scmp.eq.s32.totalorder %s33, 0
      %p338 = por %p336, %p337
      %s340 = sadd.s32 %s339, 1
      %p343 = scmp.eq.s32.totalorder %s27, 1
      %p344 = scmp.ne.s32.totalorder %s339, %s341
      %p345 = scmp.eq.s32.totalorder %s27, 0
      %p346 = por %p344, %p345
      %p347 = scmp.ne.s32.totalorder %s339, %s341
      %p348 = scmp.eq.s32.totalorder %s32, 1
      %p349 = por %p347, %p348
      %p350 = scmp.ne.s32.totalorder %s341, %s342
      %p351 = scmp.eq.s32.totalorder %s32, 0
      %p352 = por %p350, %p351
      %p353 = scmp.ne.s32.totalorder %s341, %s342
      %p354 = scmp.eq.s32.totalorder %s33, 1
      %p355 = por %p353, %p354
      %p357 = scmp.ne.s32.totalorder %s342, %s356
      %p358 = scmp.eq.s32.totalorder %s33, 0
      %p359 = por %p357, %p358
      %s361 = sadd.s32 %s360, 1
      %p364 = scmp.eq.s32.totalorder %s27, 1
      %p365 = scmp.ne.s32.totalorder %s360, %s362
      %p366 = scmp.eq.s32.totalorder %s27, 0
      %p367 = por %p365, %p366
      %p368 = scmp.ne.s32.totalorder %s360, %s362
      %p369 = scmp.eq.s32.totalorder %s32, 1
      %p370 = por %p368, %p369
      %p371 = scmp.ne.s32.totalorder %s362, %s363
      %p372 = scmp.eq.s32.totalorder %s32, 0
      %p373 = por %p371, %p372
      %p374 = scmp.ne.s32.totalorder %s362, %s363
      %p375 = scmp.eq.s32.totalorder %s33, 1
      %p376 = por %p374, %p375
      %p378 = scmp.ne.s32.totalorder %s363, %s377
      %p379 = scmp.eq.s32.totalorder %s33, 0
      %p380 = por %p378, %p379
      %s382 = sadd.s32 %s381, 1
      %p385 = scmp.eq.s32.totalorder %s27, 1
      %p386 = scmp.ne.s32.totalorder %s381, %s383
      %p387 = scmp.eq.s32.totalorder %s27, 0
      %p388 = por %p386, %p387
      %p389 = scmp.ne.s32.totalorder %s381, %s383
      %p390 = scmp.eq.s32.totalorder %s32, 1
      %p391 = por %p389, %p390
      %p392 = scmp.ne.s32.totalorder %s383, %s384
      %p393 = scmp.eq.s32.totalorder %s32, 0
      %p394 = por %p392, %p393
      %p395 = scmp.ne.s32.totalorder %s383, %s384
      %p396 = scmp.eq.s32.totalorder %s33, 1
      %p397 = por %p395, %p396
      %p399 = scmp.ne.s32.totalorder %s384, %s398
      %p400 = scmp.eq.s32.totalorder %s33, 0
      %p401 = por %p399, %p400
      %s403 = sadd.s32 %s402, 1
      %p406 = scmp.eq.s32.totalorder %s27, 1
      %p407 = scmp.ne.s32.totalorder %s402, %s404
      %p408 = scmp.eq.s32.totalorder %s27, 0
      %p409 = por %p407, %p408
      %p410 = scmp.ne.s32.totalorder %s402, %s404
      %p411 = scmp.eq.s32.totalorder %s32, 1
      %p412 = por %p410, %p411
      %p413 = scmp.ne.s32.totalorder %s404, %s405
      %p414 = scmp.eq.s32.totalorder %s32, 0
      %p415 = por %p413, %p414
      %p416 = scmp.ne.s32.totalorder %s404, %s405
      %p417 = scmp.eq.s32.totalorder %s33, 1
      %p418 = por %p416, %p417
      %p420 = scmp.ne.s32.totalorder %s405, %s419
      %p421 = scmp.eq.s32.totalorder %s33, 0
      %p422 = por %p420, %p421
      %s423 = ssub.s32 %s27, %s34
      %p424 = scmp.eq.s32.totalorder %s423, 0
      %s426 = sadd.s32 %s425, 1
      %s427 = scalar_select %p424, %s425, %s426
      %p430 = pneg %p424
      %p431 = scmp.eq.s32.totalorder %s27, 1
      %p432 = por %p430, %p431
      %p433 = scmp.ne.s32.totalorder %s425, %s428
      %p434 = scmp.eq.s32.totalorder %s27, 0
      %p435 = por %p433, %p434
      %p436 = scmp.ne.s32.totalorder %s425, %s428
      %p437 = scmp.eq.s32.totalorder %s32, 1
      %p438 = por %p436, %p437
      %p439 = scmp.ne.s32.totalorder %s428, %s429
      %p440 = scmp.eq.s32.totalorder %s32, 0
      %p441 = por %p439, %p440
      %p442 = scmp.ne.s32.totalorder %s428, %s429
      %p443 = scmp.eq.s32.totalorder %s33, 1
      %p444 = por %p442, %p443
      %p446 = scmp.ne.s32.totalorder %s429, %s445
      %p447 = scmp.eq.s32.totalorder %s33, 0
      %p448 = por %p446, %p447
      %p449 = scmp.le.s32.totalorder 1, %s27
      %p450 = scmp.lt.s32.totalorder %s27, 3
      %p451 = pnand %p449, %p450
      %p452 = pneg %p451
      // Predicated region
      $region9: #{ner_forward.1} parent=5 // pred_check
        _
      $region10: #{ner_forward.1} parent=5 // pred_check_branch
        %454 = sbr.rel (%p451) target = $region12
      $region11: #{ner_forward.1} parent=5 // pred_region
        %s455 = ssub.s32 %s27, 1
        // Predicated region
        $region13: #{ner_forward.1} parent=11 // pred_check
          %p456 = pneg %p100
        $region14: #{ner_forward.1} parent=11 // pred_check_branch
          %458 = sbr.rel (%p456) target = $region16
        $region15: #{ner_forward.1} parent=11 // pred_region
          _
        $region16: #{ner_forward.1} parent=11 // pred_fallthru
          _
        // Predicated region
        $region17: #{ner_forward.1} parent=11 // pred_check
          %p459 = pneg %p121
        $region18: #{ner_forward.1} parent=11 // pred_check_branch
          %461 = sbr.rel (%p459) target = $region20
        $region19: #{ner_forward.1} parent=11 // pred_region
          _
        $region20: #{ner_forward.1} parent=11 // pred_fallthru
          _
        // Predicated region
        $region21: #{ner_forward.1} parent=11 // pred_check
          %p462 = pneg %p142
        $region22: #{ner_forward.1} parent=11 // pred_check_branch
          %464 = sbr.rel (%p462) target = $region24
        $region23: #{ner_forward.1} parent=11 // pred_region
          _
        $region24: #{ner_forward.1} parent=11 // pred_fallthru
          _
        // Predicated region
        $region25: #{ner_forward.1} parent=11 // pred_check
          %p465 = pneg %p163
        $region26: #{ner_forward.1} parent=11 // pred_check_branch
          %467 = sbr.rel (%p465) target = $region28
        $region27: #{ner_forward.1} parent=11 // pred_region
          _
        $region28: #{ner_forward.1} parent=11 // pred_fallthru
          _
        // Predicated region
        $region29: #{ner_forward.1} parent=11 // pred_check
          %p468 = pneg %p184
        $region30: #{ner_forward.1} parent=11 // pred_check_branch
          %470 = sbr.rel (%p468) target = $region32
        $region31: #{ner_forward.1} parent=11 // pred_region
          _
        $region32: #{ner_forward.1} parent=11 // pred_fallthru
          _
        // Predicated region
        $region33: #{ner_forward.1} parent=11 // pred_check
          %p471 = pneg %p205
        $region34: #{ner_forward.1} parent=11 // pred_check_branch
          %473 = sbr.rel (%p471) target = $region36
        $region35: #{ner_forward.1} parent=11 // pred_region
          _
        $region36: #{ner_forward.1} parent=11 // pred_fallthru
          _
        // Predicated region
        $region37: #{ner_forward.1} parent=11 // pred_check
          %p474 = pneg %p226
        $region38: #{ner_forward.1} parent=11 // pred_check_branch
          %476 = sbr.rel (%p474) target = $region40
        $region39: #{ner_forward.1} parent=11 // pred_region
          _
        $region40: #{ner_forward.1} parent=11 // pred_fallthru
          _
        // Predicated region
        $region41: #{ner_forward.1} parent=11 // pred_check
          %p477 = pneg %p247
        $region42: #{ner_forward.1} parent=11 // pred_check_branch
          %479 = sbr.rel (%p477) target = $region44
        $region43: #{ner_forward.1} parent=11 // pred_region
          _
        $region44: #{ner_forward.1} parent=11 // pred_fallthru
          _
        // Predicated region
        $region45: #{ner_forward.1} parent=11 // pred_check
          %p480 = pneg %p268
        $region46: #{ner_forward.1} parent=11 // pred_check_branch
          %482 = sbr.rel (%p480) target = $region48
        $region47: #{ner_forward.1} parent=11 // pred_region
          _
        $region48: #{ner_forward.1} parent=11 // pred_fallthru
          _
        // Predicated region
        $region49: #{ner_forward.1} parent=11 // pred_check
          %p483 = pneg %p289
        $region50: #{ner_forward.1} parent=11 // pred_check_branch
          %485 = sbr.rel (%p483) target = $region52
        $region51: #{ner_forward.1} parent=11 // pred_region
          _
        $region52: #{ner_forward.1} parent=11 // pred_fallthru
          _
        // Predicated region
        $region53: #{ner_forward.1} parent=11 // pred_check
          %p486 = pneg %p310
        $region54: #{ner_forward.1} parent=11 // pred_check_branch
          %488 = sbr.rel (%p486) target = $region56
        $region55: #{ner_forward.1} parent=11 // pred_region
          _
        $region56: #{ner_forward.1} parent=11 // pred_fallthru
          _
        // Predicated region
        $region57: #{ner_forward.1} parent=11 // pred_check
          %p489 = pneg %p331
        $region58: #{ner_forward.1} parent=11 // pred_check_branch
          %491 = sbr.rel (%p489) target = $region60
        $region59: #{ner_forward.1} parent=11 // pred_region
          _
        $region60: #{ner_forward.1} parent=11 // pred_fallthru
          _
        // Predicated region
        $region61: #{ner_forward.1} parent=11 // pred_check
          %p492 = pneg %p352
        $region62: #{ner_forward.1} parent=11 // pred_check_branch
          %494 = sbr.rel (%p492) target = $region64
        $region63: #{ner_forward.1} parent=11 // pred_region
          _
        $region64: #{ner_forward.1} parent=11 // pred_fallthru
          _
        // Predicated region
        $region65: #{ner_forward.1} parent=11 // pred_check
          %p495 = pneg %p373
        $region66: #{ner_forward.1} parent=11 // pred_check_branch
          %497 = sbr.rel (%p495) target = $region68
        $region67: #{ner_forward.1} parent=11 // pred_region
          _
        $region68: #{ner_forward.1} parent=11 // pred_fallthru
          _
        // Predicated region
        $region69: #{ner_forward.1} parent=11 // pred_check
          %p498 = pneg %p394
        $region70: #{ner_forward.1} parent=11 // pred_check_branch
          %500 = sbr.rel (%p498) target = $region72
        $region71: #{ner_forward.1} parent=11 // pred_region
          _
        $region72: #{ner_forward.1} parent=11 // pred_fallthru
          _
        // Predicated region
        $region73: #{ner_forward.1} parent=11 // pred_check
          %p501 = pneg %p415
        $region74: #{ner_forward.1} parent=11 // pred_check_branch
          %503 = sbr.rel (%p501) target = $region76
        $region75: #{ner_forward.1} parent=11 // pred_region
          _
        $region76: #{ner_forward.1} parent=11 // pred_fallthru
          _
      $region12: #{ner_forward.1} parent=5 // pred_fallthru
        _
      %p504 = scmp.lt.s32.totalorder %s27, 2
      // Predicated region
      $region77: #{ner_forward.1} parent=5 // pred_check
        %p505 = pneg %p504
      $region78: #{ner_forward.1} parent=5 // pred_check_branch
        %507 = sbr.rel (%p505) target = $region80
      $region79: #{ner_forward.1} parent=5 // pred_region
        // Predicated region
        $region81: #{ner_forward.1} parent=79 // pred_check
          %p508 = pneg %p47
        $region82: #{ner_forward.1} parent=79 // pred_check_branch
          %510 = sbr.rel (%p508) target = $region84
        $region83: #{ner_forward.1} parent=79 // pred_region
          %p511 = scmp.lt.s32.totalorder %s27, 1
          %s512 = scalar_select %p511, %s27, 1
          %s513 = smul.addr %s512, 8
          %s514 = scalar_lea.vmem %s0, %s513
        $region84: #{ner_forward.1} parent=79 // pred_fallthru
          _
        // Predicated region
        $region85: #{ner_forward.1} parent=79 // pred_check
          %p515 = pneg %p73
        $region86: #{ner_forward.1} parent=79 // pred_check_branch
          %517 = sbr.rel (%p515) target = $region88
        $region87: #{ner_forward.1} parent=79 // pred_region
          %p518 = scmp.lt.s32.totalorder %s27, 1
          %s519 = scalar_select %p518, %s27, 1
          %s520 = scalar_lea.vmem %s1, %s519
        $region88: #{ner_forward.1} parent=79 // pred_fallthru
          _
      $region80: #{ner_forward.1} parent=5 // pred_fallthru
        _
      %p521 = scmp.le.s32.totalorder 1, %s27
      %p522 = scmp.lt.s32.totalorder %s27, 3
      %p523 = pnand %p521, %p522
      %p524 = pneg %p523
      // Predicated region
      $region89: #{ner_forward.1} parent=5 // pred_check
        _
      $region90: #{ner_forward.1} parent=5 // pred_check_branch
        %526 = sbr.rel (%p523) target = $region92
      $region91: #{ner_forward.1} parent=5 // pred_region
        %s527 = ssub.s32 %s27, 1
        %p528 = scmp.lt.s32.totalorder %s32, 1
        %s529 = scalar_select %p528, %s32, 1
        %s530 = smul.addr %s529, 8
        %s531 = scalar_lea.vmem %s0, %s530
        %p532 = pneg %p53
        %p533 = pneg %p50
        %p534 = scmp.lt.s32.totalorder %s32, 1
        %s535 = scalar_select %p534, %s32, 1
        %s536 = scalar_lea.vmem %s1, %s535
        %p537 = pneg %p79
        %p538 = pneg %p76
        %p539 = pneg %p100
        %p540 = pneg %p97
        %p541 = pneg %p121
        %p542 = pneg %p118
        %p543 = pneg %p142
        %p544 = pneg %p139
        %p545 = pneg %p163
        %p546 = pneg %p160
        %p547 = pneg %p184
        %p548 = pneg %p181
        %p549 = pneg %p205
        %p550 = pneg %p202
        %p551 = pneg %p226
        %p552 = pneg %p223
        %p553 = pneg %p247
        %p554 = pneg %p244
        %p555 = pneg %p268
        %p556 = pneg %p265
        %p557 = pneg %p289
        %p558 = pneg %p286
        %p559 = pneg %p310
        %p560 = pneg %p307
        %p561 = pneg %p331
        %p562 = pneg %p328
        %p563 = pneg %p352
        %p564 = pneg %p349
        %p565 = pneg %p373
        %p566 = pneg %p370
        %p567 = pneg %p394
        %p568 = pneg %p391
        %p569 = pneg %p415
        %p570 = pneg %p412
        %p571 = pneg %p441
        %p572 = pneg %p438
        %s573 = sand.u32 %s428, 1
        %s574 = scalar_lea.sflag [#allocation3], %s573
        %s575 = sand.u32 %s428, 1
        %s576 = smul.addr %s575, 8
        %s577 = scalar_lea.vmem [#allocation2], %s576
        %p578 = scmp.lt.s32.totalorder %s32, 1
        %s579 = scalar_select %p578, %s32, 1
        %s580 = smul.addr %s579, 8
        %s581 = scalar_lea.vmem %s0, %s580
        %p582 = scmp.lt.s32.totalorder %s32, 1
        %s583 = scalar_select %p582, %s32, 1
        %s584 = scalar_lea.vmem %s1, %s583
        %v586 = vld [vmem:[%s581] sm:$0xff]
        %v587 = vld [vmem:[%s2] sm:$0x1]
        %v588 = vld [vmem:[%s3] sm:$0x1]
        %vm589 = vcmask 261120
        %v590 = vsel %vm589, %v586, 0.0
        %591 = vadd.xlane.f32.xlu0 %v590
        %v592 = vpop.xlane.xlu0 %591
        %v593 = vrcp.pop 32.0
        %v594 = vmul.f32 %v592, %v593
        %v595 = vsub.f32 %v586, %v594
        %v596 = vmul.f32 %v595, %v595
        %v597 = vsel %vm589, %v596, 0.0
        %598 = vadd.xlane.f32.xlu0 %v597
        %v599 = vpop.xlane.xlu0 %598
        %v600 = vmul.f32 %v599, %v593
        %v601 = vadd.f32 %v600, 1e-12
        %v602 = vrsqrt.pop %v601
        %v603 = vmul.f32 %v595, %v602
        %v605 = vlaneseq
        %v606 = vshrl.u32 %v605, 7
        %v607 = vsub.s32 0, %v606
        %v608 = vrot.slane %v587, %v607
        %v610 = vmul.f32 %v603, %v608
        %v612 = vlaneseq
        %v613 = vshrl.u32 %v612, 7
        %v614 = vsub.s32 0, %v613
        %v615 = vrot.slane %v588, %v614
        %v617 = vadd.f32 %v610, %v615
        %v618 = vld [vmem:[%s584] sm:$0x1]
        %v620 = vlaneseq
        %v621 = vshrl.u32 %v620, 7
        %v622 = vsub.s32 0, %v621
        %v623 = vrot.slane %v618, %v622
        %v625 = vpack.c.bf16 %v617, %v617
        %v626 = vld [vmem:[%s4] sm:$0xf]
        %v627 = vld [vmem:[%s4 + $0x4] sm:$0xf]
        %v628 = vld [vmem:[%s4 + $0x8] sm:$0xf]
        %v629 = vld [vmem:[%s4 + $0xc] sm:$0xf]
        %v630 = vld [vmem:[%s5] sm:$0x1]
        %v632 = vlaneseq
        %v633 = vshrl.u32 %v632, 7
        %v634 = vsub.s32 0, %v633
        %v635 = vrot.slane %v630, %v634
        %v641 = vunpack.c.l.b16 %v626
        %v642 = vunpack.c.l.b16 %v627
        %v643 = vunpack.c.l.b16 %v628
        %v644 = vunpack.c.l.b16 %v629
        %v645 = vpack.c.b16 %v642, %v641
        %v646 = vpack.c.b16 %v644, %v643
        %v650 = vsel %vm589, %v625, 0
        %652 = vmatprep.subr.bf16.mxu0 0
        %653 = vmatpush1.bf16.msra.mxu0 0
        %654 = vmatprep.subr.bf16.mxu0 0
        %655 = vmatpush1.bf16.msra.mxu0 0
        %656 = vmatprep.subr.bf16.mxu0 0
        %657 = vmatpush1.bf16.msra.mxu0 0
        %658 = vmatprep.subr.bf16.mxu0 0
        %659 = vmatpush1.bf16.msra.mxu0 0
        %660 = vmatprep.subr.bf16.mxu0 0
        %661 = vmatpush1.bf16.msra.mxu0 0
        %662 = vmatprep.subr.bf16.mxu0 0
        %663 = vmatpush1.bf16.msra.mxu0 0
        %664 = vmatprep.subr.bf16.mxu0 0
        %665 = vmatpush1.bf16.msra.mxu0 %v646
        %666 = vmatprep.subr.bf16.mxu0 0
        %667 = vmatpush1.bf16.msra.mxu0 %v645
        %668 = vmatprep.subr.bf16.mxu0 0
        %669 = vmatpush2.bf16.msra.mxu0 0
        %670 = vmatprep.subr.bf16.mxu0 0
        %671 = vmatpush2.bf16.msra.mxu0 0
        %672 = vmatprep.subr.bf16.mxu0 0
        %673 = vmatpush2.bf16.msra.mxu0 0
        %674 = vmatprep.subr.bf16.mxu0 0
        %675 = vmatpush2.bf16.msra.mxu0 0
        %676 = vmatprep.subr.bf16.mxu0 0
        %677 = vmatpush2.bf16.msra.mxu0 0
        %678 = vmatprep.subr.bf16.mxu0 0
        %679 = vmatpush2.bf16.msra.mxu0 0
        %680 = vmatprep.subr.bf16.mxu0 0
        %681 = vmatpush2.bf16.msra.mxu0 0
        %682 = vmatprep.subr.bf16.mxu0 0
        %683 = vmatpush2.bf16.msra.mxu0 0
        %684 = vmatprep.mubr.bf16.mxu0 0
        %685 = vmatmul.mubr.bf16.gmra.mxu0 %v650
        %v686 = vpop.f32.mrf.mxu0
        %v687 = vadd.f32 %v635, %v686
        %v688 = vpop.f32.mrf.mxu0
        %v689 = vpop.f32.mrf.mxu0
        %v690 = vpop.f32.mrf.mxu0
        %691 = vdwg.mxu0
        %v692 = vpack.c.bf16 %v687, %v687
        %694 = vrot.lane.b32.xlu0 %v692, 96
        %v695 = vpop.permute.xlu0 %694
        %vm696 = vcmask 130048
        %v698 = vsel %vm696, %v692, 0
        %v701 = vsel %vm696, %v695, 0
        %703 = vmatprep.subr.bf16.mxu0 0
        %704 = vmatpush1.bf16.xpose.msra.mxu0 0
        %705 = vmatprep.subr.bf16.mxu0 0
        %706 = vmatpush1.bf16.xpose.msra.mxu0 0
        %707 = vmatprep.subr.bf16.mxu0 0
        %708 = vmatpush1.bf16.xpose.msra.mxu0 0
        %709 = vmatprep.subr.bf16.mxu0 0
        %710 = vmatpush1.bf16.xpose.msra.mxu0 0
        %711 = vmatprep.subr.bf16.mxu0 0
        %712 = vmatpush1.bf16.xpose.msra.mxu0 0
        %713 = vmatprep.subr.bf16.mxu0 0
        %714 = vmatpush1.bf16.xpose.msra.mxu0 0
        %715 = vmatprep.subr.bf16.mxu0 0
        %716 = vmatpush1.bf16.xpose.msra.mxu0 0
        %717 = vmatprep.subr.bf16.mxu0 0
        %718 = vmatpush1.bf16.xpose.msra.mxu0 %v701
        %719 = vmatprep.subr.bf16.mxu0 0
        %720 = vmatpush2.bf16.xpose.msra.mxu0 0
        %721 = vmatprep.subr.bf16.mxu0 0
        %722 = vmatpush2.bf16.xpose.msra.mxu0 0
        %723 = vmatprep.subr.bf16.mxu0 0
        %724 = vmatpush2.bf16.xpose.msra.mxu0 0
        %725 = vmatprep.subr.bf16.mxu0 0
        %726 = vmatpush2.bf16.xpose.msra.mxu0 0
        %727 = vmatprep.subr.bf16.mxu0 0
        %728 = vmatpush2.bf16.xpose.msra.mxu0 0
        %729 = vmatprep.subr.bf16.mxu0 0
        %730 = vmatpush2.bf16.xpose.msra.mxu0 0
        %731 = vmatprep.subr.bf16.mxu0 0
        %732 = vmatpush2.bf16.xpose.msra.mxu0 0
        %733 = vmatprep.subr.bf16.mxu0 0
        %734 = vmatpush2.bf16.xpose.msra.mxu0 0
        %735 = vmatprep.mubr.bf16.mxu0 0
        %736 = vmatmul.mubr.bf16.gmra.mxu0 %v698
        %v737 = vpop.f32.mrf.mxu0
        %v738 = vadd.f32 0.0, %v737
        %v739 = vpop.f32.mrf.mxu0
        %v740 = vpop.f32.mrf.mxu0
        %v741 = vpop.f32.mrf.mxu0
        %742 = vdwg.mxu0
        %v743 = vmul.f32 %v738, 0.25
        %v744 = vadd.f32 %v743, %v623
        %vm745 = vcmask 64512
        %v746 = vsel %vm745, %v744, -inf
        %747 = vmax.xlane.f32.xlu0 %v746
        %v748 = vpop.xlane.xlu0 %747
        %v749 = vsub.f32 %v744, %v748
        %v750 = vmul.f32 %v749, 1.442695
        %v751 = vpow.pop %v750
        %v752 = vsel %vm745, %v751, 0.0
        %753 = vadd.xlane.f32.xlu0 %v752
        %v754 = vpop.xlane.xlu0 %753
        %v755 = vrcp.pop %v754
        %v756 = vmul.f32 %v751, %v755
        %v757 = vpack.c.bf16 %v756, %v756
        %758 = vrot.lane.b32.xlu0 %v692, 64
        %v759 = vpop.permute.xlu0 %758
        %v761 = vsel %vm745, %v757, 0
        %vm763 = vcmask 1043456
        %v765 = vsel %vm763, %v759, 0
        %767 = vmatprep.subr.bf16.mxu0 0
        %768 = vmatpush1.bf16.msra.mxu0 0
        %769 = vmatprep.subr.bf16.mxu0 0
        %770 = vmatpush1.bf16.msra.mxu0 0
        %771 = vmatprep.subr.bf16.mxu0 0
        %772 = vmatpush1.bf16.msra.mxu0 0
        %773 = vmatprep.subr.bf16.mxu0 0
        %774 = vmatpush1.bf16.msra.mxu0 0
        %775 = vmatprep.subr.bf16.mxu0 0
        %776 = vmatpush1.bf16.msra.mxu0 0
        %777 = vmatprep.subr.bf16.mxu0 0
        %778 = vmatpush1.bf16.msra.mxu0 0
        %779 = vmatprep.subr.bf16.mxu0 0
        %780 = vmatpush1.bf16.msra.mxu0 0
        %781 = vmatprep.subr.bf16.mxu0 0
        %782 = vmatpush1.bf16.msra.mxu0 %v765
        %783 = vmatprep.subr.bf16.mxu0 0
        %784 = vmatpush2.bf16.msra.mxu0 0
        %785 = vmatprep.subr.bf16.mxu0 0
        %786 = vmatpush2.bf16.msra.mxu0 0
        %787 = vmatprep.subr.bf16.mxu0 0
        %788 = vmatpush2.bf16.msra.mxu0 0
        %789 = vmatprep.subr.bf16.mxu0 0
        %790 = vmatpush2.bf16.msra.mxu0 0
        %791 = vmatprep.subr.bf16.mxu0 0
        %792 = vmatpush2.bf16.msra.mxu0 0
        %793 = vmatprep.subr.bf16.mxu0 0
        %794 = vmatpush2.bf16.msra.mxu0 0
        %795 = vmatprep.subr.bf16.mxu0 0
        %796 = vmatpush2.bf16.msra.mxu0 0
        %797 = vmatprep.subr.bf16.mxu0 0
        %798 = vmatpush2.bf16.msra.mxu0 0
        %799 = vmatprep.mubr.bf16.mxu0 0
        %800 = vmatmul.mubr.bf16.gmra.mxu0 %v761
        %v801 = vpop.f32.mrf.mxu0
        %v802 = vadd.f32 0.0, %v801
        %v803 = vpop.f32.mrf.mxu0
        %v804 = vpop.f32.mrf.mxu0
        %v805 = vpop.f32.mrf.mxu0
        %806 = vdwg.mxu0
        %807 = vrot.lane.b32.xlu0 %v692, 112
        %v808 = vpop.permute.xlu0 %807
        %809 = vrot.lane.b32.xlu0 %v692, 80
        %v810 = vpop.permute.xlu0 %809
        %v812 = vsel %vm696, %v808, 0
        %v815 = vsel %vm696, %v810, 0
        %817 = vmatprep.subr.bf16.mxu0 0
        %818 = vmatpush1.bf16.xpose.msra.mxu0 0
        %819 = vmatprep.subr.bf16.mxu0 0
        %820 = vmatpush1.bf16.xpose.msra.mxu0 0
        %821 = vmatprep.subr.bf16.mxu0 0
        %822 = vmatpush1.bf16.xpose.msra.mxu0 0
        %823 = vmatprep.subr.bf16.mxu0 0
        %824 = vmatpush1.bf16.xpose.msra.mxu0 0
        %825 = vmatprep.subr.bf16.mxu0 0
        %826 = vmatpush1.bf16.xpose.msra.mxu0 0
        %827 = vmatprep.subr.bf16.mxu0 0
        %828 = vmatpush1.bf16.xpose.msra.mxu0 0
        %829 = vmatprep.subr.bf16.mxu0 0
        %830 = vmatpush1.bf16.xpose.msra.mxu0 0
        %831 = vmatprep.subr.bf16.mxu0 0
        %832 = vmatpush1.bf16.xpose.msra.mxu0 %v815
        %833 = vmatprep.subr.bf16.mxu0 0
        %834 = vmatpush2.bf16.xpose.msra.mxu0 0
        %835 = vmatprep.subr.bf16.mxu0 0
        %836 = vmatpush2.bf16.xpose.msra.mxu0 0
        %837 = vmatprep.subr.bf16.mxu0 0
        %838 = vmatpush2.bf16.xpose.msra.mxu0 0
        %839 = vmatprep.subr.bf16.mxu0 0
        %840 = vmatpush2.bf16.xpose.msra.mxu0 0
        %841 = vmatprep.subr.bf16.mxu0 0
        %842 = vmatpush2.bf16.xpose.msra.mxu0 0
        %843 = vmatprep.subr.bf16.mxu0 0
        %844 = vmatpush2.bf16.xpose.msra.mxu0 0
        %845 = vmatprep.subr.bf16.mxu0 0
        %846 = vmatpush2.bf16.xpose.msra.mxu0 0
        %847 = vmatprep.subr.bf16.mxu0 0
        %848 = vmatpush2.bf16.xpose.msra.mxu0 0
        %849 = vmatprep.mubr.bf16.mxu0 0
        %850 = vmatmul.mubr.bf16.gmra.mxu0 %v812
        %v851 = vpop.f32.mrf.mxu0
        %v852 = vadd.f32 0.0, %v851
        %v853 = vpop.f32.mrf.mxu0
        %v854 = vpop.f32.mrf.mxu0
        %v855 = vpop.f32.mrf.mxu0
        %856 = vdwg.mxu0
        %v857 = vmul.f32 %v852, 0.25
        %v858 = vadd.f32 %v857, %v623
        %v859 = vsel %vm745, %v858, -inf
        %860 = vmax.xlane.f32.xlu0 %v859
        %v861 = vpop.xlane.xlu0 %860
        %v862 = vsub.f32 %v858, %v861
        %v863 = vmul.f32 %v862, 1.442695
        %v864 = vpow.pop %v863
        %v865 = vsel %vm745, %v864, 0.0
        %866 = vadd.xlane.f32.xlu0 %v865
        %v867 = vpop.xlane.xlu0 %866
        %v868 = vrcp.pop %v867
        %v869 = vmul.f32 %v864, %v868
        %v870 = vpack.c.bf16 %v869, %v869
        %871 = vrot.lane.b32.xlu0 %v692, 48
        %v872 = vpop.permute.xlu0 %871
        %v874 = vsel %vm745, %v870, 0
        %v877 = vsel %vm763, %v872, 0
        %879 = vmatprep.subr.bf16.mxu0 0
        %880 = vmatpush1.bf16.msra.mxu0 0
        %881 = vmatprep.subr.bf16.mxu0 0
        %882 = vmatpush1.bf16.msra.mxu0 0
        %883 = vmatprep.subr.bf16.mxu0 0
        %884 = vmatpush1.bf16.msra.mxu0 0
        %885 = vmatprep.subr.bf16.mxu0 0
        %886 = vmatpush1.bf16.msra.mxu0 0
        %887 = vmatprep.subr.bf16.mxu0 0
        %888 = vmatpush1.bf16.msra.mxu0 0
        %889 = vmatprep.subr.bf16.mxu0 0
        %890 = vmatpush1.bf16.msra.mxu0 0
        %891 = vmatprep.subr.bf16.mxu0 0
        %892 = vmatpush1.bf16.msra.mxu0 0
        %893 = vmatprep.subr.bf16.mxu0 0
        %894 = vmatpush1.bf16.msra.mxu0 %v877
        %895 = vmatprep.subr.bf16.mxu0 0
        %896 = vmatpush2.bf16.msra.mxu0 0
        %897 = vmatprep.subr.bf16.mxu0 0
        %898 = vmatpush2.bf16.msra.mxu0 0
        %899 = vmatprep.subr.bf16.mxu0 0
        %900 = vmatpush2.bf16.msra.mxu0 0
        %901 = vmatprep.subr.bf16.mxu0 0
        %902 = vmatpush2.bf16.msra.mxu0 0
        %903 = vmatprep.subr.bf16.mxu0 0
        %904 = vmatpush2.bf16.msra.mxu0 0
        %905 = vmatprep.subr.bf16.mxu0 0
        %906 = vmatpush2.bf16.msra.mxu0 0
        %907 = vmatprep.subr.bf16.mxu0 0
        %908 = vmatpush2.bf16.msra.mxu0 0
        %909 = vmatprep.subr.bf16.mxu0 0
        %910 = vmatpush2.bf16.msra.mxu0 0
        %911 = vmatprep.mubr.bf16.mxu0 0
        %912 = vmatmul.mubr.bf16.gmra.mxu0 %v874
        %v913 = vpop.f32.mrf.mxu0
        %v914 = vadd.f32 0.0, %v913
        %v915 = vpop.f32.mrf.mxu0
        %v916 = vpop.f32.mrf.mxu0
        %v917 = vpop.f32.mrf.mxu0
        %918 = vdwg.mxu0
        %920 = vrot.lane.b32.xlu0 %v914, 16
        %v921 = vpop.permute.xlu0 %920
        %v923 = vsel %vm696, %v802, %v921
        %v924 = vpack.c.bf16 %v923, %v923
        %v925 = vld [vmem:[%s6] sm:$0xf]
        %v926 = vld [vmem:[%s6 + $0x4] sm:$0xf]
        %v927 = vld [vmem:[%s6 + $0x8] sm:$0xf]
        %v928 = vld [vmem:[%s6 + $0xc] sm:$0xf]
        %v929 = vld [vmem:[%s7] sm:$0x1]
        %v931 = vlaneseq
        %v932 = vshrl.u32 %v931, 7
        %v933 = vsub.s32 0, %v932
        %v934 = vrot.slane %v929, %v933
        %v940 = vunpack.c.l.b16 %v925
        %v941 = vunpack.c.l.b16 %v926
        %v942 = vunpack.c.l.b16 %v927
        %v943 = vunpack.c.l.b16 %v928
        %v944 = vpack.c.b16 %v941, %v940
        %v945 = vpack.c.b16 %v943, %v942
        %v949 = vsel %vm589, %v924, 0
        %951 = vmatprep.subr.bf16.mxu0 0
        %952 = vmatpush1.bf16.msra.mxu0 0
        %953 = vmatprep.subr.bf16.mxu0 0
        %954 = vmatpush1.bf16.msra.mxu0 0
        %955 = vmatprep.subr.bf16.mxu0 0
        %956 = vmatpush1.bf16.msra.mxu0 0
        %957 = vmatprep.subr.bf16.mxu0 0
        %958 = vmatpush1.bf16.msra.mxu0 0
        %959 = vmatprep.subr.bf16.mxu0 0
        %960 = vmatpush1.bf16.msra.mxu0 0
        %961 = vmatprep.subr.bf16.mxu0 0
        %962 = vmatpush1.bf16.msra.mxu0 0
        %963 = vmatprep.subr.bf16.mxu0 0
        %964 = vmatpush1.bf16.msra.mxu0 %v945
        %965 = vmatprep.subr.bf16.mxu0 0
        %966 = vmatpush1.bf16.msra.mxu0 %v944
        %967 = vmatprep.subr.bf16.mxu0 0
        %968 = vmatpush2.bf16.msra.mxu0 0
        %969 = vmatprep.subr.bf16.mxu0 0
        %970 = vmatpush2.bf16.msra.mxu0 0
        %971 = vmatprep.subr.bf16.mxu0 0
        %972 = vmatpush2.bf16.msra.mxu0 0
        %973 = vmatprep.subr.bf16.mxu0 0
        %974 = vmatpush2.bf16.msra.mxu0 0
        %975 = vmatprep.subr.bf16.mxu0 0
        %976 = vmatpush2.bf16.msra.mxu0 0
        %977 = vmatprep.subr.bf16.mxu0 0
        %978 = vmatpush2.bf16.msra.mxu0 0
        %979 = vmatprep.subr.bf16.mxu0 0
        %980 = vmatpush2.bf16.msra.mxu0 0
        %981 = vmatprep.subr.bf16.mxu0 0
        %982 = vmatpush2.bf16.msra.mxu0 0
        %983 = vmatprep.mubr.bf16.mxu0 0
        %984 = vmatmul.mubr.bf16.gmra.mxu0 %v949
        %v985 = vpop.f32.mrf.mxu0
        %v986 = vadd.f32 %v934, %v985
        %v987 = vpop.f32.mrf.mxu0
        %v988 = vpop.f32.mrf.mxu0
        %v989 = vpop.f32.mrf.mxu0
        %990 = vdwg.mxu0
        %v991 = vadd.f32 %v986, %v617
        %v992 = vld [vmem:[%s8] sm:$0x1]
        %v993 = vld [vmem:[%s9] sm:$0x1]
        %v994 = vsel %vm589, %v991, 0.0
        %995 = vadd.xlane.f32.xlu0 %v994
        %v996 = vpop.xlane.xlu0 %995
        %v997 = vmul.f32 %v996, %v593
        %v998 = vsub.f32 %v991, %v997
        %v999 = vmul.f32 %v998, %v998
        %v1000 = vsel %vm589, %v999, 0.0
        %1001 = vadd.xlane.f32.xlu0 %v1000
        %v1002 = vpop.xlane.xlu0 %1001
        %v1003 = vmul.f32 %v1002, %v593
        %v1004 = vadd.f32 %v1003, 1e-12
        %v1005 = vrsqrt.pop %v1004
        %v1006 = vmul.f32 %v998, %v1005
        %v1008 = vlaneseq
        %v1009 = vshrl.u32 %v1008, 7
        %v1010 = vsub.s32 0, %v1009
        %v1011 = vrot.slane %v992, %v1010
        %v1013 = vmul.f32 %v1006, %v1011
        %v1015 = vlaneseq
        %v1016 = vshrl.u32 %v1015, 7
        %v1017 = vsub.s32 0, %v1016
        %v1018 = vrot.slane %v993, %v1017
        %v1020 = vadd.f32 %v1013, %v1018
        %v1021 = vpack.c.bf16 %v1020, %v1020
        %v1022 = vld [vmem:[%s10] sm:$0xf]
        %v1023 = vld [vmem:[%s10 + $0x4] sm:$0xf]
        %v1024 = vld [vmem:[%s10 + $0x8] sm:$0xf]
        %v1025 = vld [vmem:[%s10 + $0xc] sm:$0xf]
        %v1026 = vld [vmem:[%s11] sm:$0x1]
        %v1028 = vlaneseq
        %v1029 = vshrl.u32 %v1028, 7
        %v1030 = vsub.s32 0, %v1029
        %v1031 = vrot.slane %v1026, %v1030
        %v1037 = vunpack.c.l.b16 %v1022
        %v1038 = vunpack.c.l.b16 %v1023
        %v1039 = vunpack.c.l.b16 %v1024
        %v1040 = vunpack.c.l.b16 %v1025
        %v1041 = vpack.c.b16 %v1038, %v1037
        %v1042 = vpack.c.b16 %v1040, %v1039
        %v1046 = vsel %vm589, %v1021, 0
        %1048 = vmatprep.subr.bf16.mxu0 0
        %1049 = vmatpush1.bf16.msra.mxu0 0
        %1050 = vmatprep.subr.bf16.mxu0 0
        %1051 = vmatpush1.bf16.msra.mxu0 0
        %1052 = vmatprep.subr.bf16.mxu0 0
        %1053 = vmatpush1.bf16.msra.mxu0 0
        %1054 = vmatprep.subr.bf16.mxu0 0
        %1055 = vmatpush1.bf16.msra.mxu0 0
        %1056 = vmatprep.subr.bf16.mxu0 0
        %1057 = vmatpush1.bf16.msra.mxu0 0
        %1058 = vmatprep.subr.bf16.mxu0 0
        %1059 = vmatpush1.bf16.msra.mxu0 0
        %1060 = vmatprep.subr.bf16.mxu0 0
        %1061 = vmatpush1.bf16.msra.mxu0 %v1042
        %1062 = vmatprep.subr.bf16.mxu0 0
        %1063 = vmatpush1.bf16.msra.mxu0 %v1041
        %1064 = vmatprep.subr.bf16.mxu0 0
        %1065 = vmatpush2.bf16.msra.mxu0 0
        %1066 = vmatprep.subr.bf16.mxu0 0
        %1067 = vmatpush2.bf16.msra.mxu0 0
        %1068 = vmatprep.subr.bf16.mxu0 0
        %1069 = vmatpush2.bf16.msra.mxu0 0
        %1070 = vmatprep.subr.bf16.mxu0 0
        %1071 = vmatpush2.bf16.msra.mxu0 0
        %1072 = vmatprep.subr.bf16.mxu0 0
        %1073 = vmatpush2.bf16.msra.mxu0 0
        %1074 = vmatprep.subr.bf16.mxu0 0
        %1075 = vmatpush2.bf16.msra.mxu0 0
        %1076 = vmatprep.subr.bf16.mxu0 0
        %1077 = vmatpush2.bf16.msra.mxu0 0
        %1078 = vmatprep.subr.bf16.mxu0 0
        %1079 = vmatpush2.bf16.msra.mxu0 0
        %1080 = vmatprep.mubr.bf16.mxu0 0
        %1081 = vmatmul.mubr.bf16.gmra.mxu0 %v1046
        %v1082 = vpop.f32.mrf.mxu0
        %v1083 = vadd.f32 %v1031, %v1082
        %v1084 = vpop.f32.mrf.mxu0
        %v1085 = vpop.f32.mrf.mxu0
        %v1086 = vpop.f32.mrf.mxu0
        %1087 = vdwg.mxu0
        %v1088 = vmul.f32 %v1083, 0.5
        %v1089 = vmul.f32 %v1083, 0.044715
        %v1090 = vmul.f32 %v1089, %v1083
        %v1091 = vmul.f32 %v1090, %v1083
        %v1092 = vadd.f32 %v1083, %v1091
        %v1093 = vmul.f32 %v1092, 0.7978846
        %v1094 = vtanh.pop %v1093
        %v1095 = vadd.f32 %v1094, 1.0
        %v1096 = vmul.f32 %v1088, %v1095
        %v1097 = vpack.c.bf16 %v1096, %v1096
        %v1098 = vld [vmem:[%s12] sm:$0xf]
        %v1099 = vld [vmem:[%s12 + $0x4] sm:$0xf]
        %v1100 = vld [vmem:[%s12 + $0x8] sm:$0xf]
        %v1101 = vld [vmem:[%s12 + $0xc] sm:$0xf]
        %v1102 = vld [vmem:[%s12 + $0x10] sm:$0xf]
        %v1103 = vld [vmem:[%s12 + $0x14] sm:$0xf]
        %v1104 = vld [vmem:[%s12 + $0x18] sm:$0xf]
        %v1105 = vld [vmem:[%s12 + $0x1c] sm:$0xf]
        %v1106 = vld [vmem:[%s13] sm:$0x1]
        %v1108 = vlaneseq
        %v1109 = vshrl.u32 %v1108, 7
        %v1110 = vsub.s32 0, %v1109
        %v1111 = vrot.slane %v1106, %v1110
        %v1121 = vunpack.c.l.b16 %v1098
        %v1122 = vunpack.c.l.b16 %v1099
        %v1123 = vunpack.c.l.b16 %v1100
        %v1124 = vunpack.c.l.b16 %v1101
        %v1125 = vunpack.c.l.b16 %v1102
        %v1126 = vunpack.c.l.b16 %v1103
        %v1127 = vunpack.c.l.b16 %v1104
        %v1128 = vunpack.c.l.b16 %v1105
        %v1129 = vpack.c.b16 %v1122, %v1121
        %v1130 = vpack.c.b16 %v1124, %v1123
        %v1131 = vpack.c.b16 %v1126, %v1125
        %v1132 = vpack.c.b16 %v1128, %v1127
        %vm1137 = vcmask 523264
        %v1139 = vsel %vm1137, %v1097, 0
        %1141 = vmatprep.subr.bf16.mxu0 0
        %1142 = vmatpush1.bf16.msra.mxu0 0
        %1143 = vmatprep.subr.bf16.mxu0 0
        %1144 = vmatpush1.bf16.msra.mxu0 0
        %1145 = vmatprep.subr.bf16.mxu0 0
        %1146 = vmatpush1.bf16.msra.mxu0 0
        %1147 = vmatprep.subr.bf16.mxu0 0
        %1148 = vmatpush1.bf16.msra.mxu0 0
        %1149 = vmatprep.subr.bf16.mxu0 0
        %1150 = vmatpush1.bf16.msra.mxu0 %v1132
        %1151 = vmatprep.subr.bf16.mxu0 0
        %1152 = vmatpush1.bf16.msra.mxu0 %v1131
        %1153 = vmatprep.subr.bf16.mxu0 0
        %1154 = vmatpush1.bf16.msra.mxu0 %v1130
        %1155 = vmatprep.subr.bf16.mxu0 0
        %1156 = vmatpush1.bf16.msra.mxu0 %v1129
        %1157 = vmatprep.subr.bf16.mxu0 0
        %1158 = vmatpush2.bf16.msra.mxu0 0
        %1159 = vmatprep.subr.bf16.mxu0 0
        %1160 = vmatpush2.bf16.msra.mxu0 0
        %1161 = vmatprep.subr.bf16.mxu0 0
        %1162 = vmatpush2.bf16.msra.mxu0 0
        %1163 = vmatprep.subr.bf16.mxu0 0
        %1164 = vmatpush2.bf16.msra.mxu0 0
        %1165 = vmatprep.subr.bf16.mxu0 0
        %1166 = vmatpush2.bf16.msra.mxu0 0
        %1167 = vmatprep.subr.bf16.mxu0 0
        %1168 = vmatpush2.bf16.msra.mxu0 0
        %1169 = vmatprep.subr.bf16.mxu0 0
        %1170 = vmatpush2.bf16.msra.mxu0 0
        %1171 = vmatprep.subr.bf16.mxu0 0
        %1172 = vmatpush2.bf16.msra.mxu0 0
        %1173 = vmatprep.mubr.bf16.mxu0 0
        %1174 = vmatmul.mubr.bf16.gmra.mxu0 %v1139
        %v1175 = vpop.f32.mrf.mxu0
        %v1176 = vadd.f32 %v1111, %v1175
        %v1177 = vpop.f32.mrf.mxu0
        %v1178 = vpop.f32.mrf.mxu0
        %v1179 = vpop.f32.mrf.mxu0
        %1180 = vdwg.mxu0
        %v1181 = vadd.f32 %v1176, %v1020
        %v1182 = vld [vmem:[%s14] sm:$0x1]
        %v1183 = vld [vmem:[%s15] sm:$0x1]
        %v1184 = vsel %vm589, %v1181, 0.0
        %1185 = vadd.xlane.f32.xlu0 %v1184
        %v1186 = vpop.xlane.xlu0 %1185
        %v1187 = vmul.f32 %v1186, %v593
        %v1188 = vsub.f32 %v1181, %v1187
        %v1189 = vmul.f32 %v1188, %v1188
        %v1190 = vsel %vm589, %v1189, 0.0
        %1191 = vadd.xlane.f32.xlu0 %v1190
        %v1192 = vpop.xlane.xlu0 %1191
        %v1193 = vmul.f32 %v1192, %v593
        %v1194 = vadd.f32 %v1193, 1e-12
        %v1195 = vrsqrt.pop %v1194
        %v1196 = vmul.f32 %v1188, %v1195
        %v1198 = vlaneseq
        %v1199 = vshrl.u32 %v1198, 7
        %v1200 = vsub.s32 0, %v1199
        %v1201 = vrot.slane %v1182, %v1200
        %v1203 = vmul.f32 %v1196, %v1201
        %v1205 = vlaneseq
        %v1206 = vshrl.u32 %v1205, 7
        %v1207 = vsub.s32 0, %v1206
        %v1208 = vrot.slane %v1183, %v1207
        %v1210 = vadd.f32 %v1203, %v1208
        %v1211 = vpack.c.bf16 %v1210, %v1210
        %s1212 = scalar_lea.vmem %s4, 16
        %v1213 = vld [vmem:[%s1212] sm:$0xf]
        %v1214 = vld [vmem:[%s1212 + $0x4] sm:$0xf]
        %v1215 = vld [vmem:[%s1212 + $0x8] sm:$0xf]
        %v1216 = vld [vmem:[%s1212 + $0xc] sm:$0xf]
        %s1217 = scalar_lea.vmem %s5, 1
        %v1218 = vld [vmem:[%s1217] sm:$0x1]
        %v1220 = vlaneseq
        %v1221 = vshrl.u32 %v1220, 7
        %v1222 = vsub.s32 0, %v1221
        %v1223 = vrot.slane %v1218, %v1222
        %v1229 = vunpack.c.l.b16 %v1213
        %v1230 = vunpack.c.l.b16 %v1214
        %v1231 = vunpack.c.l.b16 %v1215
        %v1232 = vunpack.c.l.b16 %v1216
        %v1233 = vpack.c.b16 %v1230, %v1229
        %v1234 = vpack.c.b16 %v1232, %v1231
        %v1238 = vsel %vm589, %v1211, 0
        %1240 = vmatprep.subr.bf16.mxu0 0
        %1241 = vmatpush1.bf16.msra.mxu0 0
        %1242 = vmatprep.subr.bf16.mxu0 0
        %1243 = vmatpush1.bf16.msra.mxu0 0
        %1244 = vmatprep.subr.bf16.mxu0 0
        %1245 = vmatpush1.bf16.msra.mxu0 0
        %1246 = vmatprep.subr.bf16.mxu0 0
        %1247 = vmatpush1.bf16.msra.mxu0 0
        %1248 = vmatprep.subr.bf16.mxu0 0
        %1249 = vmatpush1.bf16.msra.mxu0 0
        %1250 = vmatprep.subr.bf16.mxu0 0
        %1251 = vmatpush1.bf16.msra.mxu0 0
        %1252 = vmatprep.subr.bf16.mxu0 0
        %1253 = vmatpush1.bf16.msra.mxu0 %v1234
        %1254 = vmatprep.subr.bf16.mxu0 0
        %1255 = vmatpush1.bf16.msra.mxu0 %v1233
        %1256 = vmatprep.subr.bf16.mxu0 0
        %1257 = vmatpush2.bf16.msra.mxu0 0
        %1258 = vmatprep.subr.bf16.mxu0 0
        %1259 = vmatpush2.bf16.msra.mxu0 0
        %1260 = vmatprep.subr.bf16.mxu0 0
        %1261 = vmatpush2.bf16.msra.mxu0 0
        %1262 = vmatprep.subr.bf16.mxu0 0
        %1263 = vmatpush2.bf16.msra.mxu0 0
        %1264 = vmatprep.subr.bf16.mxu0 0
        %1265 = vmatpush2.bf16.msra.mxu0 0
        %1266 = vmatprep.subr.bf16.mxu0 0
        %1267 = vmatpush2.bf16.msra.mxu0 0
        %1268 = vmatprep.subr.bf16.mxu0 0
        %1269 = vmatpush2.bf16.msra.mxu0 0
        %1270 = vmatprep.subr.bf16.mxu0 0
        %1271 = vmatpush2.bf16.msra.mxu0 0
        %1272 = vmatprep.mubr.bf16.mxu0 0
        %1273 = vmatmul.mubr.bf16.gmra.mxu0 %v1238
        %v1274 = vpop.f32.mrf.mxu0
        %v1275 = vadd.f32 %v1223, %v1274
        %v1276 = vpop.f32.mrf.mxu0
        %v1277 = vpop.f32.mrf.mxu0
        %v1278 = vpop.f32.mrf.mxu0
        %1279 = vdwg.mxu0
        %v1280 = vpack.c.bf16 %v1275, %v1275
        %1282 = vrot.lane.b32.xlu0 %v1280, 96
        %v1283 = vpop.permute.xlu0 %1282
        %v1285 = vsel %vm696, %v1280, 0
        %v1288 = vsel %vm696, %v1283, 0
        %1290 = vmatprep.subr.bf16.mxu0 0
        %1291 = vmatpush1.bf16.xpose.msra.mxu0 0
        %1292 = vmatprep.subr.bf16.mxu0 0
        %1293 = vmatpush1.bf16.xpose.msra.mxu0 0
        %1294 = vmatprep.subr.bf16.mxu0 0
        %1295 = vmatpush1.bf16.xpose.msra.mxu0 0
        %1296 = vmatprep.subr.bf16.mxu0 0
        %1297 = vmatpush1.bf16.xpose.msra.mxu0 0
        %1298 = vmatprep.subr.bf16.mxu0 0
        %1299 = vmatpush1.bf16.xpose.msra.mxu0 0
        %1300 = vmatprep.subr.bf16.mxu0 0
        %1301 = vmatpush1.bf16.xpose.msra.mxu0 0
        %1302 = vmatprep.subr.bf16.mxu0 0
        %1303 = vmatpush1.bf16.xpose.msra.mxu0 0
        %1304 = vmatprep.subr.bf16.mxu0 0
        %1305 = vmatpush1.bf16.xpose.msra.mxu0 %v1288
        %1306 = vmatprep.subr.bf16.mxu0 0
        %1307 = vmatpush2.bf16.xpose.msra.mxu0 0
        %1308 = vmatprep.subr.bf16.mxu0 0
        %1309 = vmatpush2.bf16.xpose.msra.mxu0 0
        %1310 = vmatprep.subr.bf16.mxu0 0
        %1311 = vmatpush2.bf16.xpose.msra.mxu0 0
        %1312 = vmatprep.subr.bf16.mxu0 0
        %1313 = vmatpush2.bf16.xpose.msra.mxu0 0
        %1314 = vmatprep.subr.bf16.mxu0 0
        %1315 = vmatpush2.bf16.xpose.msra.mxu0 0
        %1316 = vmatprep.subr.bf16.mxu0 0
        %1317 = vmatpush2.bf16.xpose.msra.mxu0 0
        %1318 = vmatprep.subr.bf16.mxu0 0
        %1319 = vmatpush2.bf16.xpose.msra.mxu0 0
        %1320 = vmatprep.subr.bf16.mxu0 0
        %1321 = vmatpush2.bf16.xpose.msra.mxu0 0
        %1322 = vmatprep.mubr.bf16.mxu0 0
        %1323 = vmatmul.mubr.bf16.gmra.mxu0 %v1285
        %v1324 = vpop.f32.mrf.mxu0
        %v1325 = vadd.f32 0.0, %v1324
        %v1326 = vpop.f32.mrf.mxu0
        %v1327 = vpop.f32.mrf.mxu0
        %v1328 = vpop.f32.mrf.mxu0
        %1329 = vdwg.mxu0
        %v1330 = vmul.f32 %v1325, 0.25
        %v1331 = vadd.f32 %v1330, %v623
        %v1332 = vsel %vm745, %v1331, -inf
        %1333 = vmax.xlane.f32.xlu0 %v1332
        %v1334 = vpop.xlane.xlu0 %1333
        %v1335 = vsub.f32 %v1331, %v1334
        %v1336 = vmul.f32 %v1335, 1.442695
        %v1337 = vpow.pop %v1336
        %v1338 = vsel %vm745, %v1337, 0.0
        %1339 = vadd.xlane.f32.xlu0 %v1338
        %v1340 = vpop.xlane.xlu0 %1339
        %v1341 = vrcp.pop %v1340
        %v1342 = vmul.f32 %v1337, %v1341
        %v1343 = vpack.c.bf16 %v1342, %v1342
        %1344 = vrot.lane.b32.xlu0 %v1280, 64
        %v1345 = vpop.permute.xlu0 %1344
        %v1347 = vsel %vm745, %v1343, 0
        %v1350 = vsel %vm763, %v1345, 0
        %1352 = vmatprep.subr.bf16.mxu0 0
        %1353 = vmatpush1.bf16.msra.mxu0 0
        %1354 = vmatprep.subr.bf16.mxu0 0
        %1355 = vmatpush1.bf16.msra.mxu0 0
        %1356 = vmatprep.subr.bf16.mxu0 0
        %1357 = vmatpush1.bf16.msra.mxu0 0
        %1358 = vmatprep.subr.bf16.mxu0 0
        %1359 = vmatpush1.bf16.msra.mxu0 0
        %1360 = vmatprep.subr.bf16.mxu0 0
        %1361 = vmatpush1.bf16.msra.mxu0 0
        %1362 = vmatprep.subr.bf16.mxu0 0
        %1363 = vmatpush1.bf16.msra.mxu0 0
        %1364 = vmatprep.subr.bf16.mxu0 0
        %1365 = vmatpush1.bf16.msra.mxu0 0
        %1366 = vmatprep.subr.bf16.mxu0 0
        %1367 = vmatpush1.bf16.msra.mxu0 %v1350
        %1368 = vmatprep.subr.bf16.mxu0 0
        %1369 = vmatpush2.bf16.msra.mxu0 0
        %1370 = vmatprep.subr.bf16.mxu0 0
        %1371 = vmatpush2.bf16.msra.mxu0 0
        %1372 = vmatprep.subr.bf16.mxu0 0
        %1373 = vmatpush2.bf16.msra.mxu0 0
        %1374 = vmatprep.subr.bf16.mxu0 0
        %1375 = vmatpush2.bf16.msra.mxu0 0
        %1376 = vmatprep.subr.bf16.mxu0 0
        %1377 = vmatpush2.bf16.msra.mxu0 0
        %1378 = vmatprep.subr.bf16.mxu0 0
        %1379 = vmatpush2.bf16.msra.mxu0 0
        %1380 = vmatprep.subr.bf16.mxu0 0
        %1381 = vmatpush2.bf16.msra.mxu0 0
        %1382 = vmatprep.subr.bf16.mxu0 0
        %1383 = vmatpush2.bf16.msra.mxu0 0
        %1384 = vmatprep.mubr.bf16.mxu0 0
        %1385 = vmatmul.mubr.bf16.gmra.mxu0 %v1347
        %v1386 = vpop.f32.mrf.mxu0
        %v1387 = vadd.f32 0.0, %v1386
        %v1388 = vpop.f32.mrf.mxu0
        %v1389 = vpop.f32.mrf.mxu0
        %v1390 = vpop.f32.mrf.mxu0
        %1391 = vdwg.mxu0
        %1392 = vrot.lane.b32.xlu0 %v1280, 112
        %v1393 = vpop.permute.xlu0 %1392
        %1394 = vrot.lane.b32.xlu0 %v1280, 80
        %v1395 = vpop.permute.xlu0 %1394
        %v1397 = vsel %vm696, %v1393, 0
        %v1400 = vsel %vm696, %v1395, 0
        %1402 = vmatprep.subr.bf16.mxu0 0
        %1403 = vmatpush1.bf16.xpose.msra.mxu0 0
        %1404 = vmatprep.subr.bf16.mxu0 0
        %1405 = vmatpush1.bf16.xpose.msra.mxu0 0
        %1406 = vmatprep.subr.bf16.mxu0 0
        %1407 = vmatpush1.bf16.xpose.msra.mxu0 0
        %1408 = vmatprep.subr.bf16.mxu0 0
        %1409 = vmatpush1.bf16.xpose.msra.mxu0 0
        %1410 = vmatprep.subr.bf16.mxu0 0
        %1411 = vmatpush1.bf16.xpose.msra.mxu0 0
        %1412 = vmatprep.subr.bf16.mxu0 0
        %1413 = vmatpush1.bf16.xpose.msra.mxu0 0
        %1414 = vmatprep.subr.bf16.mxu0 0
        %1415 = vmatpush1.bf16.xpose.msra.mxu0 0
        %1416 = vmatprep.subr.bf16.mxu0 0
        %1417 = vmatpush1.bf16.xpose.msra.mxu0 %v1400
        %1418 = vmatprep.subr.bf16.mxu0 0
        %1419 = vmatpush2.bf16.xpose.msra.mxu0 0
        %1420 = vmatprep.subr.bf16.mxu0 0
        %1421 = vmatpush2.bf16.xpose.msra.mxu0 0
        %1422 = vmatprep.subr.bf16.mxu0 0
        %1423 = vmatpush2.bf16.xpose.msra.mxu0 0
        %1424 = vmatprep.subr.bf16.mxu0 0
        %1425 = vmatpush2.bf16.xpose.msra.mxu0 0
        %1426 = vmatprep.subr.bf16.mxu0 0
        %1427 = vmatpush2.bf16.xpose.msra.mxu0 0
        %1428 = vmatprep.subr.bf16.mxu0 0
        %1429 = vmatpush2.bf16.xpose.msra.mxu0 0
        %1430 = vmatprep.subr.bf16.mxu0 0
        %1431 = vmatpush2.bf16.xpose.msra.mxu0 0
        %1432 = vmatprep.subr.bf16.mxu0 0
        %1433 = vmatpush2.bf16.xpose.msra.mxu0 0
        %1434 = vmatprep.mubr.bf16.mxu0 0
        %1435 = vmatmul.mubr.bf16.gmra.mxu0 %v1397
        %v1436 = vpop.f32.mrf.mxu0
        %v1437 = vadd.f32 0.0, %v1436
        %v1438 = vpop.f32.mrf.mxu0
        %v1439 = vpop.f32.mrf.mxu0
        %v1440 = vpop.f32.mrf.mxu0
        %1441 = vdwg.mxu0
        %v1442 = vmul.f32 %v1437, 0.25
        %v1443 = vadd.f32 %v1442, %v623
        %v1444 = vsel %vm745, %v1443, -inf
        %1445 = vmax.xlane.f32.xlu0 %v1444
        %v1446 = vpop.xlane.xlu0 %1445
        %v1447 = vsub.f32 %v1443, %v1446
        %v1448 = vmul.f32 %v1447, 1.442695
        %v1449 = vpow.pop %v1448
        %v1450 = vsel %vm745, %v1449, 0.0
        %1451 = vadd.xlane.f32.xlu0 %v1450
        %v1452 = vpop.xlane.xlu0 %1451
        %v1453 = vrcp.pop %v1452
        %v1454 = vmul.f32 %v1449, %v1453
        %v1455 = vpack.c.bf16 %v1454, %v1454
        %1456 = vrot.lane.b32.xlu0 %v1280, 48
        %v1457 = vpop.permute.xlu0 %1456
        %v1459 = vsel %vm745, %v1455, 0
        %v1462 = vsel %vm763, %v1457, 0
        %1464 = vmatprep.subr.bf16.mxu0 0
        %1465 = vmatpush1.bf16.msra.mxu0 0
        %1466 = vmatprep.subr.bf16.mxu0 0
        %1467 = vmatpush1.bf16.msra.mxu0 0
        %1468 = vmatprep.subr.bf16.mxu0 0
        %1469 = vmatpush1.bf16.msra.mxu0 0
        %1470 = vmatprep.subr.bf16.mxu0 0
        %1471 = vmatpush1.bf16.msra.mxu0 0
        %1472 = vmatprep.subr.bf16.mxu0 0
        %1473 = vmatpush1.bf16.msra.mxu0 0
        %1474 = vmatprep.subr.bf16.mxu0 0
        %1475 = vmatpush1.bf16.msra.mxu0 0
        %1476 = vmatprep.subr.bf16.mxu0 0
        %1477 = vmatpush1.bf16.msra.mxu0 0
        %1478 = vmatprep.subr.bf16.mxu0 0
        %1479 = vmatpush1.bf16.msra.mxu0 %v1462
        %1480 = vmatprep.subr.bf16.mxu0 0
        %1481 = vmatpush2.bf16.msra.mxu0 0
        %1482 = vmatprep.subr.bf16.mxu0 0
        %1483 = vmatpush2.bf16.msra.mxu0 0
        %1484 = vmatprep.subr.bf16.mxu0 0
        %1485 = vmatpush2.bf16.msra.mxu0 0
        %1486 = vmatprep.subr.bf16.mxu0 0
        %1487 = vmatpush2.bf16.msra.mxu0 0
        %1488 = vmatprep.subr.bf16.mxu0 0
        %1489 = vmatpush2.bf16.msra.mxu0 0
        %1490 = vmatprep.subr.bf16.mxu0 0
        %1491 = vmatpush2.bf16.msra.mxu0 0
        %1492 = vmatprep.subr.bf16.mxu0 0
        %1493 = vmatpush2.bf16.msra.mxu0 0
        %1494 = vmatprep.subr.bf16.mxu0 0
        %1495 = vmatpush2.bf16.msra.mxu0 0
        %1496 = vmatprep.mubr.bf16.mxu0 0
        %1497 = vmatmul.mubr.bf16.gmra.mxu0 %v1459
        %v1498 = vpop.f32.mrf.mxu0
        %v1499 = vadd.f32 0.0, %v1498
        %v1500 = vpop.f32.mrf.mxu0
        %v1501 = vpop.f32.mrf.mxu0
        %v1502 = vpop.f32.mrf.mxu0
        %1503 = vdwg.mxu0
        %1505 = vrot.lane.b32.xlu0 %v1499, 16
        %v1506 = vpop.permute.xlu0 %1505
        %v1508 = vsel %vm696, %v1387, %v1506
        %v1509 = vpack.c.bf16 %v1508, %v1508
        %s1510 = scalar_lea.vmem %s6, 16
        %v1511 = vld [vmem:[%s1510] sm:$0xf]
        %v1512 = vld [vmem:[%s1510 + $0x4] sm:$0xf]
        %v1513 = vld [vmem:[%s1510 + $0x8] sm:$0xf]
        %v1514 = vld [vmem:[%s1510 + $0xc] sm:$0xf]
        %s1515 = scalar_lea.vmem %s7, 1
        %v1516 = vld [vmem:[%s1515] sm:$0x1]
        %v1518 = vlaneseq
        %v1519 = vshrl.u32 %v1518, 7
        %v1520 = vsub.s32 0, %v1519
        %v1521 = vrot.slane %v1516, %v1520
        %v1527 = vunpack.c.l.b16 %v1511
        %v1528 = vunpack.c.l.b16 %v1512
        %v1529 = vunpack.c.l.b16 %v1513
        %v1530 = vunpack.c.l.b16 %v1514
        %v1531 = vpack.c.b16 %v1528, %v1527
        %v1532 = vpack.c.b16 %v1530, %v1529
        %v1536 = vsel %vm589, %v1509, 0
        %1538 = vmatprep.subr.bf16.mxu0 0
        %1539 = vmatpush1.bf16.msra.mxu0 0
        %1540 = vmatprep.subr.bf16.mxu0 0
        %1541 = vmatpush1.bf16.msra.mxu0 0
        %1542 = vmatprep.subr.bf16.mxu0 0
        %1543 = vmatpush1.bf16.msra.mxu0 0
        %1544 = vmatprep.subr.bf16.mxu0 0
        %1545 = vmatpush1.bf16.msra.mxu0 0
        %1546 = vmatprep.subr.bf16.mxu0 0
        %1547 = vmatpush1.bf16.msra.mxu0 0
        %1548 = vmatprep.subr.bf16.mxu0 0
        %1549 = vmatpush1.bf16.msra.mxu0 0
        %1550 = vmatprep.subr.bf16.mxu0 0
        %1551 = vmatpush1.bf16.msra.mxu0 %v1532
        %1552 = vmatprep.subr.bf16.mxu0 0
        %1553 = vmatpush1.bf16.msra.mxu0 %v1531
        %1554 = vmatprep.subr.bf16.mxu0 0
        %1555 = vmatpush2.bf16.msra.mxu0 0
        %1556 = vmatprep.subr.bf16.mxu0 0
        %1557 = vmatpush2.bf16.msra.mxu0 0
        %1558 = vmatprep.subr.bf16.mxu0 0
        %1559 = vmatpush2.bf16.msra.mxu0 0
        %1560 = vmatprep.subr.bf16.mxu0 0
        %1561 = vmatpush2.bf16.msra.mxu0 0
        %1562 = vmatprep.subr.bf16.mxu0 0
        %1563 = vmatpush2.bf16.msra.mxu0 0
        %1564 = vmatprep.subr.bf16.mxu0 0
        %1565 = vmatpush2.bf16.msra.mxu0 0
        %1566 = vmatprep.subr.bf16.mxu0 0
        %1567 = vmatpush2.bf16.msra.mxu0 0
        %1568 = vmatprep.subr.bf16.mxu0 0
        %1569 = vmatpush2.bf16.msra.mxu0 0
        %1570 = vmatprep.mubr.bf16.mxu0 0
        %1571 = vmatmul.mubr.bf16.gmra.mxu0 %v1536
        %v1572 = vpop.f32.mrf.mxu0
        %v1573 = vadd.f32 %v1521, %v1572
        %v1574 = vpop.f32.mrf.mxu0
        %v1575 = vpop.f32.mrf.mxu0
        %v1576 = vpop.f32.mrf.mxu0
        %1577 = vdwg.mxu0
        %v1578 = vadd.f32 %v1573, %v1210
        %s1579 = scalar_lea.vmem %s8, 1
        %v1580 = vld [vmem:[%s1579] sm:$0x1]
        %s1581 = scalar_lea.vmem %s9, 1
        %v1582 = vld [vmem:[%s1581] sm:$0x1]
        %v1583 = vsel %vm589, %v1578, 0.0
        %1584 = vadd.xlane.f32.xlu0 %v1583
        %v1585 = vpop.xlane.xlu0 %1584
        %v1586 = vmul.f32 %v1585, %v593
        %v1587 = vsub.f32 %v1578, %v1586
        %v1588 = vmul.f32 %v1587, %v1587
        %v1589 = vsel %vm589, %v1588, 0.0
        %1590 = vadd.xlane.f32.xlu0 %v1589
        %v1591 = vpop.xlane.xlu0 %1590
        %v1592 = vmul.f32 %v1591, %v593
        %v1593 = vadd.f32 %v1592, 1e-12
        %v1594 = vrsqrt.pop %v1593
        %v1595 = vmul.f32 %v1587, %v1594
        %v1597 = vlaneseq
        %v1598 = vshrl.u32 %v1597, 7
        %v1599 = vsub.s32 0, %v1598
        %v1600 = vrot.slane %v1580, %v1599
        %v1602 = vmul.f32 %v1595, %v1600
        %v1604 = vlaneseq
        %v1605 = vshrl.u32 %v1604, 7
        %v1606 = vsub.s32 0, %v1605
        %v1607 = vrot.slane %v1582, %v1606
        %v1609 = vadd.f32 %v1602, %v1607
        %v1610 = vpack.c.bf16 %v1609, %v1609
        %s1611 = scalar_lea.vmem %s10, 16
        %v1612 = vld [vmem:[%s1611] sm:$0xf]
        %v1613 = vld [vmem:[%s1611 + $0x4] sm:$0xf]
        %v1614 = vld [vmem:[%s1611 + $0x8] sm:$0xf]
        %v1615 = vld [vmem:[%s1611 + $0xc] sm:$0xf]
        %s1616 = scalar_lea.vmem %s11, 1
        %v1617 = vld [vmem:[%s1616] sm:$0x1]
        %v1619 = vlaneseq
        %v1620 = vshrl.u32 %v1619, 7
        %v1621 = vsub.s32 0, %v1620
        %v1622 = vrot.slane %v1617, %v1621
        %v1628 = vunpack.c.l.b16 %v1612
        %v1629 = vunpack.c.l.b16 %v1613
        %v1630 = vunpack.c.l.b16 %v1614
        %v1631 = vunpack.c.l.b16 %v1615
        %v1632 = vpack.c.b16 %v1629, %v1628
        %v1633 = vpack.c.b16 %v1631, %v1630
        %v1637 = vsel %vm589, %v1610, 0
        %1639 = vmatprep.subr.bf16.mxu0 0
        %1640 = vmatpush1.bf16.msra.mxu0 0
        %1641 = vmatprep.subr.bf16.mxu0 0
        %1642 = vmatpush1.bf16.msra.mxu0 0
        %1643 = vmatprep.subr.bf16.mxu0 0
        %1644 = vmatpush1.bf16.msra.mxu0 0
        %1645 = vmatprep.subr.bf16.mxu0 0
        %1646 = vmatpush1.bf16.msra.mxu0 0
        %1647 = vmatprep.subr.bf16.mxu0 0
        %1648 = vmatpush1.bf16.msra.mxu0 0
        %1649 = vmatprep.subr.bf16.mxu0 0
        %1650 = vmatpush1.bf16.msra.mxu0 0
        %1651 = vmatprep.subr.bf16.mxu0 0
        %1652 = vmatpush1.bf16.msra.mxu0 %v1633
        %1653 = vmatprep.subr.bf16.mxu0 0
        %1654 = vmatpush1.bf16.msra.mxu0 %v1632
        %1655 = vmatprep.subr.bf16.mxu0 0
        %1656 = vmatpush2.bf16.msra.mxu0 0
        %1657 = vmatprep.subr.bf16.mxu0 0
        %1658 = vmatpush2.bf16.msra.mxu0 0
        %1659 = vmatprep.subr.bf16.mxu0 0
        %1660 = vmatpush2.bf16.msra.mxu0 0
        %1661 = vmatprep.subr.bf16.mxu0 0
        %1662 = vmatpush2.bf16.msra.mxu0 0
        %1663 = vmatprep.subr.bf16.mxu0 0
        %1664 = vmatpush2.bf16.msra.mxu0 0
        %1665 = vmatprep.subr.bf16.mxu0 0
        %1666 = vmatpush2.bf16.msra.mxu0 0
        %1667 = vmatprep.subr.bf16.mxu0 0
        %1668 = vmatpush2.bf16.msra.mxu0 0
        %1669 = vmatprep.subr.bf16.mxu0 0
        %1670 = vmatpush2.bf16.msra.mxu0 0
        %1671 = vmatprep.mubr.bf16.mxu0 0
        %1672 = vmatmul.mubr.bf16.gmra.mxu0 %v1637
        %v1673 = vpop.f32.mrf.mxu0
        %v1674 = vadd.f32 %v1622, %v1673
        %v1675 = vpop.f32.mrf.mxu0
        %v1676 = vpop.f32.mrf.mxu0
        %v1677 = vpop.f32.mrf.mxu0
        %1678 = vdwg.mxu0
        %v1679 = vmul.f32 %v1674, 0.5
        %v1680 = vmul.f32 %v1674, 0.044715
        %v1681 = vmul.f32 %v1680, %v1674
        %v1682 = vmul.f32 %v1681, %v1674
        %v1683 = vadd.f32 %v1674, %v1682
        %v1684 = vmul.f32 %v1683, 0.7978846
        %v1685 = vtanh.pop %v1684
        %v1686 = vadd.f32 %v1685, 1.0
        %v1687 = vmul.f32 %v1679, %v1686
        %v1688 = vpack.c.bf16 %v1687, %v1687
        %s1689 = scalar_lea.vmem %s12, 32
        %v1690 = vld [vmem:[%s1689] sm:$0xf]
        %v1691 = vld [vmem:[%s1689 + $0x4] sm:$0xf]
        %v1692 = vld [vmem:[%s1689 + $0x8] sm:$0xf]
        %v1693 = vld [vmem:[%s1689 + $0xc] sm:$0xf]
        %v1694 = vld [vmem:[%s1689 + $0x10] sm:$0xf]
        %v1695 = vld [vmem:[%s1689 + $0x14] sm:$0xf]
        %v1696 = vld [vmem:[%s1689 + $0x18] sm:$0xf]
        %v1697 = vld [vmem:[%s1689 + $0x1c] sm:$0xf]
        %s1698 = scalar_lea.vmem %s13, 1
        %v1699 = vld [vmem:[%s1698] sm:$0x1]
        %v1701 = vlaneseq
        %v1702 = vshrl.u32 %v1701, 7
        %v1703 = vsub.s32 0, %v1702
        %v1704 = vrot.slane %v1699, %v1703
        %v1714 = vunpack.c.l.b16 %v1690
        %v1715 = vunpack.c.l.b16 %v1691
        %v1716 = vunpack.c.l.b16 %v1692
        %v1717 = vunpack.c.l.b16 %v1693
        %v1718 = vunpack.c.l.b16 %v1694
        %v1719 = vunpack.c.l.b16 %v1695
        %v1720 = vunpack.c.l.b16 %v1696
        %v1721 = vunpack.c.l.b16 %v1697
        %v1722 = vpack.c.b16 %v1715, %v1714
        %v1723 = vpack.c.b16 %v1717, %v1716
        %v1724 = vpack.c.b16 %v1719, %v1718
        %v1725 = vpack.c.b16 %v1721, %v1720
        %v1731 = vsel %vm1137, %v1688, 0
        %1733 = vmatprep.subr.bf16.mxu0 0
        %1734 = vmatpush1.bf16.msra.mxu0 0
        %1735 = vmatprep.subr.bf16.mxu0 0
        %1736 = vmatpush1.bf16.msra.mxu0 0
        %1737 = vmatprep.subr.bf16.mxu0 0
        %1738 = vmatpush1.bf16.msra.mxu0 0
        %1739 = vmatprep.subr.bf16.mxu0 0
        %1740 = vmatpush1.bf16.msra.mxu0 0
        %1741 = vmatprep.subr.bf16.mxu0 0
        %1742 = vmatpush1.bf16.msra.mxu0 %v1725
        %1743 = vmatprep.subr.bf16.mxu0 0
        %1744 = vmatpush1.bf16.msra.mxu0 %v1724
        %1745 = vmatprep.subr.bf16.mxu0 0
        %1746 = vmatpush1.bf16.msra.mxu0 %v1723
        %1747 = vmatprep.subr.bf16.mxu0 0
        %1748 = vmatpush1.bf16.msra.mxu0 %v1722
        %1749 = vmatprep.subr.bf16.mxu0 0
        %1750 = vmatpush2.bf16.msra.mxu0 0
        %1751 = vmatprep.subr.bf16.mxu0 0
        %1752 = vmatpush2.bf16.msra.mxu0 0
        %1753 = vmatprep.subr.bf16.mxu0 0
        %1754 = vmatpush2.bf16.msra.mxu0 0
        %1755 = vmatprep.subr.bf16.mxu0 0
        %1756 = vmatpush2.bf16.msra.mxu0 0
        %1757 = vmatprep.subr.bf16.mxu0 0
        %1758 = vmatpush2.bf16.msra.mxu0 0
        %1759 = vmatprep.subr.bf16.mxu0 0
        %1760 = vmatpush2.bf16.msra.mxu0 0
        %1761 = vmatprep.subr.bf16.mxu0 0
        %1762 = vmatpush2.bf16.msra.mxu0 0
        %1763 = vmatprep.subr.bf16.mxu0 0
        %1764 = vmatpush2.bf16.msra.mxu0 0
        %1765 = vmatprep.mubr.bf16.mxu0 0
        %1766 = vmatmul.mubr.bf16.gmra.mxu0 %v1731
        %v1767 = vpop.f32.mrf.mxu0
        %v1768 = vadd.f32 %v1704, %v1767
        %v1769 = vpop.f32.mrf.mxu0
        %v1770 = vpop.f32.mrf.mxu0
        %v1771 = vpop.f32.mrf.mxu0
        %1772 = vdwg.mxu0
        %v1773 = vadd.f32 %v1768, %v1609
        %s1774 = scalar_lea.vmem %s14, 1
        %v1775 = vld [vmem:[%s1774] sm:$0x1]
        %s1776 = scalar_lea.vmem %s15, 1
        %v1777 = vld [vmem:[%s1776] sm:$0x1]
        %v1778 = vsel %vm589, %v1773, 0.0
        %1779 = vadd.xlane.f32.xlu0 %v1778
        %v1780 = vpop.xlane.xlu0 %1779
        %v1781 = vmul.f32 %v1780, %v593
        %v1782 = vsub.f32 %v1773, %v1781
        %v1783 = vmul.f32 %v1782, %v1782
        %v1784 = vsel %vm589, %v1783, 0.0
        %1785 = vadd.xlane.f32.xlu0 %v1784
        %v1786 = vpop.xlane.xlu0 %1785
        %v1787 = vmul.f32 %v1786, %v593
        %v1788 = vadd.f32 %v1787, 1e-12
        %v1789 = vrsqrt.pop %v1788
        %v1790 = vmul.f32 %v1782, %v1789
        %v1792 = vlaneseq
        %v1793 = vshrl.u32 %v1792, 7
        %v1794 = vsub.s32 0, %v1793
        %v1795 = vrot.slane %v1775, %v1794
        %v1797 = vmul.f32 %v1790, %v1795
        %v1799 = vlaneseq
        %v1800 = vshrl.u32 %v1799, 7
        %v1801 = vsub.s32 0, %v1800
        %v1802 = vrot.slane %v1777, %v1801
        %v1804 = vadd.f32 %v1797, %v1802
        %v1805 = vpack.c.bf16 %v1804, %v1804
        %v1806 = vld [vmem:[%s16] sm:$0xf]
        %v1807 = vld [vmem:[%s16 + $0x4] sm:$0xf]
        %v1808 = vld [vmem:[%s16 + $0x8] sm:$0xf]
        %v1809 = vld [vmem:[%s16 + $0xc] sm:$0xf]
        %v1810 = vld [vmem:[%s17] sm:$0x1]
        %v1812 = vlaneseq
        %v1813 = vshrl.u32 %v1812, 7
        %v1814 = vsub.s32 0, %v1813
        %v1815 = vrot.slane %v1810, %v1814
        %v1821 = vunpack.c.l.b16 %v1806
        %v1822 = vunpack.c.l.b16 %v1807
        %v1823 = vunpack.c.l.b16 %v1808
        %v1824 = vunpack.c.l.b16 %v1809
        %v1825 = vpack.c.b16 %v1822, %v1821
        %v1826 = vpack.c.b16 %v1824, %v1823
        %v1830 = vsel %vm589, %v1805, 0
        %1832 = vmatprep.subr.bf16.mxu0 0
        %1833 = vmatpush1.bf16.msra.mxu0 0
        %1834 = vmatprep.subr.bf16.mxu0 0
        %1835 = vmatpush1.bf16.msra.mxu0 0
        %1836 = vmatprep.subr.bf16.mxu0 0
        %1837 = vmatpush1.bf16.msra.mxu0 0
        %1838 = vmatprep.subr.bf16.mxu0 0
        %1839 = vmatpush1.bf16.msra.mxu0 0
        %1840 = vmatprep.subr.bf16.mxu0 0
        %1841 = vmatpush1.bf16.msra.mxu0 0
        %1842 = vmatprep.subr.bf16.mxu0 0
        %1843 = vmatpush1.bf16.msra.mxu0 0
        %1844 = vmatprep.subr.bf16.mxu0 0
        %1845 = vmatpush1.bf16.msra.mxu0 %v1826
        %1846 = vmatprep.subr.bf16.mxu0 0
        %1847 = vmatpush1.bf16.msra.mxu0 %v1825
        %1848 = vmatprep.subr.bf16.mxu0 0
        %1849 = vmatpush2.bf16.msra.mxu0 0
        %1850 = vmatprep.subr.bf16.mxu0 0
        %1851 = vmatpush2.bf16.msra.mxu0 0
        %1852 = vmatprep.subr.bf16.mxu0 0
        %1853 = vmatpush2.bf16.msra.mxu0 0
        %1854 = vmatprep.subr.bf16.mxu0 0
        %1855 = vmatpush2.bf16.msra.mxu0 0
        %1856 = vmatprep.subr.bf16.mxu0 0
        %1857 = vmatpush2.bf16.msra.mxu0 0
        %1858 = vmatprep.subr.bf16.mxu0 0
        %1859 = vmatpush2.bf16.msra.mxu0 0
        %1860 = vmatprep.subr.bf16.mxu0 0
        %1861 = vmatpush2.bf16.msra.mxu0 0
        %1862 = vmatprep.subr.bf16.mxu0 0
        %1863 = vmatpush2.bf16.msra.mxu0 0
        %1864 = vmatprep.mubr.bf16.mxu0 0
        %1865 = vmatmul.mubr.bf16.gmra.mxu0 %v1830
        %v1866 = vpop.f32.mrf.mxu0
        %v1867 = vadd.f32 %v1815, %v1866
        %v1868 = vpop.f32.mrf.mxu0
        %v1869 = vpop.f32.mrf.mxu0
        %v1870 = vpop.f32.mrf.mxu0
        %1871 = vdwg.mxu0
        %1872 = vst [vmem:[%s577] sm:$0xff] %v1867
        %s1873 = sand.u32 %s428, 1
        %s1874 = scalar_lea.sflag [#allocation3], %s1873
        %s1875 = sand.u32 %s428, 1
        %s1876 = smul.addr %s1875, 8
        %s1877 = scalar_lea.vmem [#allocation2], %s1876
        // Predicated region
        $region93: #{ner_forward.1} parent=91 // pred_check
          %p1878 = pneg %p438
        $region94: #{ner_forward.1} parent=91 // pred_check_branch
          %1880 = sbr.rel (%p1878) target = $region96
        $region95: #{ner_forward.1} parent=91 // pred_region
          %s1882 = ssub.s32 128, 128
          %1883 = vsyncadd %s1874, %s1882
          %s1884 = smul.addr %s32, 128
          %s1885 = scalar_lea.hbm %s18, %s1884
          %s1887 = sshll.u32 %s1877, 4
          %s1888 = int_to_ptr.vmem [resolvable:$true] %s1887
          %1890 = dma.vmem_to_hbm [thread:$0]  %s1888, 128, %s1885, %s1874
        $region96: #{ner_forward.1} parent=91 // pred_fallthru
          _
      $region92: #{ner_forward.1} parent=5 // pred_fallthru
        _
      %p1891 = scmp.le.s32.totalorder 2, %s27
      // Predicated region
      $region97: #{ner_forward.1} parent=5 // pred_check
        %p1892 = pneg %p1891
      $region98: #{ner_forward.1} parent=5 // pred_check_branch
        %1894 = sbr.rel (%p1892) target = $region100
      $region99: #{ner_forward.1} parent=5 // pred_region
        %s1895 = ssub.s32 %s27, 2
        // Predicated region
        $region101: #{ner_forward.1} parent=99 // pred_check
          %p1896 = pneg %p444
        $region102: #{ner_forward.1} parent=99 // pred_check_branch
          %1898 = sbr.rel (%p1896) target = $region104
        $region103: #{ner_forward.1} parent=99 // pred_region
          %s1899 = sand.u32 %s429, 1
          %s1900 = scalar_lea.sflag [#allocation3], %s1899
          %s1901 = sand.u32 %s429, 1
          %s1902 = smul.addr %s1901, 8
          %s1903 = scalar_lea.vmem [#allocation2], %s1902
          %1904 = dma.done %s1900, 128
        $region104: #{ner_forward.1} parent=99 // pred_fallthru
          _
      $region100: #{ner_forward.1} parent=5 // pred_fallthru
        _
    $region6: #{ner_forward.1} parent=1 // loop_footer
      %s31 = sadd.s32 1, %s27
    $region7: #{ner_forward.1} parent=1 // loop_footer_branch
      %26 = sbr.rel target = $region3
    $region8: #{ner_forward.1} parent=1 // loop_exit
      _
    %1905 = vsyncpa [#allocation3], 1
    %s1906 = scalar_lea.sflag [#allocation3], 1
    %1907 = vsyncpa %s1906, 1

</llo_original>
